<compile_context>
chip_gen: v7x
topology: tpu7x:2x2x1
jax: 0.10.0
libtpu: 0.0.40
codegen_flags: <defaults>
</compile_context>

<pallas_src>
import functools
import math

import jax
import jax.numpy as jnp
import numpy as np
from jax.experimental import pallas as pl
from jax.experimental.pallas import tpu as pltpu

MATMUL_DTYPE = jnp.bfloat16      # MXU input dtype; accumulation is always f32
LN_EPS = 1e-5                    # PyTorch LayerNorm default
_VMEM_LIMIT = 32 * 1024 * 1024   # explicit, safe on v5e/v6e/v7x


# --------------------------------------------------------------- utilities --

def _block_m(M):
    """Row-tile size: full array when small, else a 128-ish multiple of 8."""
    if M <= 512:
        return M
    for cand in (512, 256, 128, 64, 32, 16, 8):
        if M % cand == 0:
            return cand
    return M


def _row_parallel_params():
    return pltpu.CompilerParams(
        dimension_semantics=("parallel",),
        vmem_limit_bytes=_VMEM_LIMIT,
    )


def _round_up(n, m):
    return ((n + m - 1) // m) * m


# ----------------------------------------------------------------- kernels --

def _linear_kernel(x_ref, w_ref, b_ref, o_ref):
    # (bm,K) @ (K,N) + (1,N) -> (bm,N); bf16 MXU inputs, f32 accumulate.
    x = x_ref[...].astype(w_ref.dtype)
    o_ref[...] = (
        jnp.dot(x, w_ref[...], preferred_element_type=jnp.float32) + b_ref[...]
    ).astype(o_ref.dtype)


def linear(x, w, b, out_dtype=jnp.float32):
    """x:(M,K) @ w:(K,N) + b:(N,) -> (M,N) out_dtype, row-tiled grid."""
    M, K = x.shape
    N = w.shape[1]
    bm = _block_m(M)
    return pl.pallas_call(
        _linear_kernel,
        out_shape=jax.ShapeDtypeStruct((M, N), out_dtype),
        grid=(M // bm,),
        in_specs=[
            pl.BlockSpec((bm, K), lambda i: (i, 0)),
            pl.BlockSpec((K, N), lambda i: (0, 0)),
            pl.BlockSpec((1, N), lambda i: (0, 0)),
        ],
        out_specs=pl.BlockSpec((bm, N), lambda i: (i, 0)),
        compiler_params=_row_parallel_params(),
    )(x, w, b.reshape(1, N))


def _proj_add_ln_kernel(a_ref, r_ref, w_ref, b_ref, g_ref, bb_ref, o_ref):
    # LayerNorm( (a @ W + b) + residual )  -- attention out-proj epilogue
    a = a_ref[...].astype(w_ref.dtype)
    y = jnp.dot(a, w_ref[...], preferred_element_type=jnp.float32) + b_ref[...]
    y = y + r_ref[...]
    mean = jnp.mean(y, axis=-1, keepdims=True)
    var = jnp.mean(jnp.square(y - mean), axis=-1, keepdims=True)
    yhat = (y - mean) * jax.lax.rsqrt(var + LN_EPS)
    o_ref[...] = (yhat * g_ref[...] + bb_ref[...]).astype(o_ref.dtype)


def proj_add_ln(a, residual, w, b, gamma, beta):
    M, K = a.shape
    E = w.shape[1]
    bm = _block_m(M)
    return pl.pallas_call(
        _proj_add_ln_kernel,
        out_shape=jax.ShapeDtypeStruct((M, E), jnp.float32),
        grid=(M // bm,),
        in_specs=[
            pl.BlockSpec((bm, K), lambda i: (i, 0)),
            pl.BlockSpec((bm, E), lambda i: (i, 0)),
            pl.BlockSpec((K, E), lambda i: (0, 0)),
            pl.BlockSpec((1, E), lambda i: (0, 0)),
            pl.BlockSpec((1, E), lambda i: (0, 0)),
            pl.BlockSpec((1, E), lambda i: (0, 0)),
        ],
        out_specs=pl.BlockSpec((bm, E), lambda i: (i, 0)),
        compiler_params=_row_parallel_params(),
    )(a, residual, w, b.reshape(1, E), gamma.reshape(1, E), beta.reshape(1, E))


def _ffn_add_ln_kernel(x_ref, w1_ref, b1_ref, w2_ref, b2_ref, g_ref, bb_ref, o_ref):
    # LayerNorm( relu(x @ W1 + b1) @ W2 + b2 + x )
    x = x_ref[...]
    h = jnp.dot(x.astype(w1_ref.dtype), w1_ref[...],
                preferred_element_type=jnp.float32) + b1_ref[...]
    h = jnp.maximum(h, 0.0)
    f = jnp.dot(h.astype(w2_ref.dtype), w2_ref[...],
                preferred_element_type=jnp.float32) + b2_ref[...]
    y = f + x
    mean = jnp.mean(y, axis=-1, keepdims=True)
    var = jnp.mean(jnp.square(y - mean), axis=-1, keepdims=True)
    yhat = (y - mean) * jax.lax.rsqrt(var + LN_EPS)
    o_ref[...] = (yhat * g_ref[...] + bb_ref[...]).astype(o_ref.dtype)


def ffn_add_ln(x, w1, b1, w2, b2, gamma, beta):
    M, E = x.shape
    F = w1.shape[1]
    bm = _block_m(M)
    return pl.pallas_call(
        _ffn_add_ln_kernel,
        out_shape=jax.ShapeDtypeStruct((M, E), jnp.float32),
        grid=(M // bm,),
        in_specs=[
            pl.BlockSpec((bm, E), lambda i: (i, 0)),
            pl.BlockSpec((E, F), lambda i: (0, 0)),
            pl.BlockSpec((1, F), lambda i: (0, 0)),
            pl.BlockSpec((F, E), lambda i: (0, 0)),
            pl.BlockSpec((1, E), lambda i: (0, 0)),
            pl.BlockSpec((1, E), lambda i: (0, 0)),
            pl.BlockSpec((1, E), lambda i: (0, 0)),
        ],
        out_specs=pl.BlockSpec((bm, E), lambda i: (i, 0)),
        compiler_params=_row_parallel_params(),
    )(x, w1, b1.reshape(1, F), w2, b2.reshape(1, E),
      gamma.reshape(1, E), beta.reshape(1, E))


def _cross_proj_kernel(xq_ref, xm_ref, wq_ref, bq_ref, wkv_ref, bkv_ref,
                       q_ref, kv_ref):
    # Cross-attention projections in one launch: Q from decoder x, fused KV from memory.
    xq = xq_ref[...].astype(wq_ref.dtype)
    xm = xm_ref[...].astype(wkv_ref.dtype)
    q_ref[...] = (jnp.dot(xq, wq_ref[...], preferred_element_type=jnp.float32)
                  + bq_ref[...]).astype(q_ref.dtype)
    kv_ref[...] = (jnp.dot(xm, wkv_ref[...], preferred_element_type=jnp.float32)
                   + bkv_ref[...]).astype(kv_ref.dtype)


def cross_proj(xq, xm, wq, bq, wkv, bkv):
    Mq, E = xq.shape
    Mk = xm.shape[0]
    return pl.pallas_call(
        _cross_proj_kernel,
        out_shape=(jax.ShapeDtypeStruct((Mq, E), MATMUL_DTYPE),
                   jax.ShapeDtypeStruct((Mk, 2 * E), MATMUL_DTYPE)),
        compiler_params=pltpu.CompilerParams(vmem_limit_bytes=_VMEM_LIMIT),
    )(xq, xm, wq, bq.reshape(1, E), wkv, bkv.reshape(1, 2 * E))


def _attn_kernel(q_ref, k_ref, v_ref, o_ref, *, scale):
    # All B*H heads in one block: q,k,v:(BH,S,Dh); batched matmuls via einsum.
    q = q_ref[...].astype(MATMUL_DTYPE)
    k = k_ref[...].astype(MATMUL_DTYPE)
    v = v_ref[...].astype(MATMUL_DTYPE)
    s = jnp.einsum("bqd,bkd->bqk", q, k,
                   preferred_element_type=jnp.float32) * scale
    m = jnp.max(s, axis=-1, keepdims=True)
    p = jnp.exp(s - m)
    denom = jnp.sum(p, axis=-1, keepdims=True)
    p = p * pl.reciprocal(denom, approx=True)          # EUP slot, not VALU divide
    o_ref[...] = jnp.einsum("bqk,bkd->bqd", p.astype(MATMUL_DTYPE), v,
                            preferred_element_type=jnp.float32).astype(o_ref.dtype)


def attention(q, k, v):
    """q:(BH,Sq,Dh) k,v:(BH,Sk,Dh) -> (BH,Sq,Dh) bf16; single ungridded launch."""
    BH, Sq, Dh = q.shape
    kernel = functools.partial(_attn_kernel, scale=1.0 / math.sqrt(Dh))
    return pl.pallas_call(
        kernel,
        out_shape=jax.ShapeDtypeStruct((BH, Sq, Dh), MATMUL_DTYPE),
        compiler_params=pltpu.CompilerParams(vmem_limit_bytes=_VMEM_LIMIT),
    )(q, k, v)


# ------------------------------------------------------------- model pieces --

def _split_heads(t, S, B, H, Dh):
    # (S*B, E) seq-major -> (B*H, S, Dh)
    return t.reshape(S, B, H, Dh).transpose(1, 2, 0, 3).reshape(B * H, S, Dh)


def _split_packed_heads(t, S, B, H, Dh, n):
    # (S*B, n*E) -> n tensors of (B*H, S, Dh) with one reshape+transpose
    t = t.reshape(S, B, n, H, Dh).transpose(2, 1, 3, 0, 4).reshape(n, B * H, S, Dh)
    return tuple(t[i] for i in range(n))


def _merge_heads(o, S, B, H, Dh):
    # (B*H, S, Dh) -> (S*B, E)
    return o.reshape(B, H, S, Dh).transpose(2, 0, 1, 3).reshape(S * B, H * Dh)


def self_attn_block(x, p, ln_w, ln_b, num_heads):
    """Post-norm self-attention sub-block: LN(x + MHA(x)). x:(S,B,E)."""
    S, B, E = x.shape
    Dh = E // num_heads
    x_flat = x.reshape(S * B, E)
    qkv = linear(x_flat, p["w_qkv"], p["b_qkv"], out_dtype=MATMUL_DTYPE)  # (M,3E)
    q, k, v = _split_packed_heads(qkv, S, B, num_heads, Dh, 3)
    o = attention(q, k, v)
    o = _merge_heads(o, S, B, num_heads, Dh)
    y = proj_add_ln(o, x_flat, p["w_out"], p["b_out"], ln_w, ln_b)
    return y.reshape(S, B, E)


def cross_attn_block(x, memory, p, ln_w, ln_b, num_heads):
    """Post-norm cross-attention sub-block: LN(x + MHA(x, memory))."""
    Sq, B, E = x.shape
    Sk = memory.shape[0]
    Dh = E // num_heads
    x_flat = x.reshape(Sq * B, E)
    m_flat = memory.reshape(Sk * B, E)
    q, kv = cross_proj(x_flat, m_flat, p["w_q"], p["b_q"], p["w_kv"], p["b_kv"])
    k, v = _split_packed_heads(kv, Sk, B, num_heads, Dh, 2)
    o = attention(_split_heads(q, Sq, B, num_heads, Dh), k, v)
    o = _merge_heads(o, Sq, B, num_heads, Dh)
    y = proj_add_ln(o, x_flat, p["w_out"], p["b_out"], ln_w, ln_b)
    return y.reshape(Sq, B, E)


def encoder_layer(x, p, num_heads):
    # PyTorch TransformerEncoderLayer, norm_first=False, relu, eval mode
    S, B, E = x.shape
    x1 = self_attn_block(x, p["self_attn"], p["norm1_w"], p["norm1_b"], num_heads)
    x2 = ffn_add_ln(x1.reshape(S * B, E),
                    p["linear1_w"], p["linear1_b"],
                    p["linear2_w"], p["linear2_b"],
                    p["norm2_w"], p["norm2_b"])
    return x2.reshape(S, B, E)


def decoder_layer(x, memory, p, num_heads):
    # PyTorch TransformerDecoderLayer, norm_first=False, relu, eval mode
    S, B, E = x.shape
    x1 = self_attn_block(x, p["self_attn"], p["norm1_w"], p["norm1_b"], num_heads)
    x2 = cross_attn_block(x1, memory, p["cross_attn"],
                          p["norm2_w"], p["norm2_b"], num_heads)
    x3 = ffn_add_ln(x2.reshape(S * B, E),
                    p["linear1_w"], p["linear1_b"],
                    p["linear2_w"], p["linear2_b"],
                    p["norm3_w"], p["norm3_b"])
    return x3.reshape(S, B, E)


def transformer_forward(params, enc_tokens, dec_tokens, *, num_heads, output_dim):
    # TODO(synk): attention / key-padding masks are not plumbed (None in this test).
    E = params["pe"].shape[-1]

    # ---- encoder ----
    emb = jnp.take(params["enc_embedding"], enc_tokens, axis=0)   # (B,S,E)
    emb = emb + params["pe"][:, : emb.shape[1], :]
    x = jnp.transpose(emb, (1, 0, 2))                             # (S,B,E)
    for p in params["enc_layers"]:
        x = encoder_layer(x, p, num_heads)
    memory = x

    # ---- decoder ----
    demb = jnp.take(params["dec_embedding"], dec_tokens, axis=0)  # (B,S,E)
    demb = demb + params["pe"][:, : demb.shape[1], :]
    y = jnp.transpose(demb, (1, 0, 2))                            # (S,B,E)
    for p in params["dec_layers"]:
        y = decoder_layer(y, memory, p, num_heads)

    out = jnp.transpose(y, (1, 0, 2))                             # (B,S,E)
    B, S, _ = out.shape
    logits_pad = linear(out.reshape(B * S, E),
                        params["fc_out_w"], params["fc_out_b"])   # lane-dense (M,128k)
    logits = logits_pad[:, :output_dim]
    return logits.reshape(B, S, output_dim)


# ----------------------------------------------------------------- init glue --

def make_positional_encoding(dim_model, max_len):
    pos = np.arange(0, max_len + 2, dtype=np.float32)[:, None]
    div_term = np.exp(
        np.arange(0, dim_model, 2, dtype=np.float32) * (-np.log(10000.0) / dim_model)
    )
    pe = np.zeros((max_len + 2, dim_model), dtype=np.float32)
    pe[:, 0::2] = np.sin(pos * div_term)
    pe[:, 1::2] = np.cos(pos * div_term)
    return jnp.asarray(pe[None])  # (1, max_len+2, dim)


def init_params(key, input_dim, output_dim, max_len, dim_model, num_heads,
                num_layers, ff_hidden):
    keys = iter(jax.random.split(key, 4096))

    def W(shape, scale=0.02, dtype=MATMUL_DTYPE):
        w = scale * jax.random.normal(next(keys), shape, dtype=jnp.float32)
        return w.astype(dtype)

    def self_attn_params():
        # weights stored pre-transposed (in_dim, out_dim); QKV fused along N.
        return dict(
            w_qkv=W((dim_model, 3 * dim_model)),
            b_qkv=W((3 * dim_model,), dtype=jnp.float32),
            w_out=W((dim_model, dim_model)),
            b_out=jnp.zeros((dim_model,), jnp.float32),
        )

    def cross_attn_params():
        return dict(
            w_q=W((dim_model, dim_model)),
            b_q=W((dim_model,), dtype=jnp.float32),
            w_kv=W((dim_model, 2 * dim_model)),
            b_kv=W((2 * dim_model,), dtype=jnp.float32),
            w_out=W((dim_model, dim_model)),
            b_out=jnp.zeros((dim_model,), jnp.float32),
        )

    def ln():
        return jnp.ones((dim_model,), jnp.float32), jnp.zeros((dim_model,), jnp.float32)

    def enc_layer_params():
        n1w, n1b = ln()
        n2w, n2b = ln()
        return dict(
            self_attn=self_attn_params(),
            linear1_w=W((dim_model, ff_hidden)),
            linear1_b=W((ff_hidden,), dtype=jnp.float32),
            linear2_w=W((ff_hidden, dim_model)),
            linear2_b=W((dim_model,), dtype=jnp.float32),
            norm1_w=n1w, norm1_b=n1b, norm2_w=n2w, norm2_b=n2b,
        )

    def dec_layer_params():
        n1w, n1b = ln()
        n2w, n2b = ln()
        n3w, n3b = ln()
        return dict(
            self_attn=self_attn_params(),
            cross_attn=cross_attn_params(),
            linear1_w=W((dim_model, ff_hidden)),
            linear1_b=W((ff_hidden,), dtype=jnp.float32),
            linear2_w=W((ff_hidden, dim_model)),
            linear2_b=W((dim_model,), dtype=jnp.float32),
            norm1_w=n1w, norm1_b=n1b, norm2_w=n2w, norm2_b=n2b,
            norm3_w=n3w, norm3_b=n3b,
        )

    # fc_out padded to a 128-lane multiple for dense vector stores.
    n_pad = _round_up(output_dim, 128)
    fc_w = jnp.zeros((dim_model, n_pad), jnp.float32)
    fc_w = fc_w.at[:, :output_dim].set(
        0.02 * jax.random.normal(next(keys), (dim_model, output_dim), dtype=jnp.float32))

    return dict(
        enc_embedding=W((input_dim, dim_model), scale=1.0, dtype=jnp.float32),
        dec_embedding=W((output_dim, dim_model), scale=1.0, dtype=jnp.float32),
        pe=make_positional_encoding(dim_model, max_len),
        enc_layers=[enc_layer_params() for _ in range(num_layers)],
        dec_layers=[dec_layer_params() for _ in range(num_layers)],
        fc_out_w=fc_w.astype(MATMUL_DTYPE),
        fc_out_b=jnp.zeros((n_pad,), jnp.float32),
    )


# --------------------------------------------------------------------- main --

if __name__ == "__main__":
    # small config consistent with the module
    input_dim, output_dim = 50, 60
    max_len = 16
    dim_model, num_heads = 32, 4
    num_layers = 2
    ff_hidden = 64
    batch, seq_enc, seq_dec = 2, 8, 8

    key = jax.random.PRNGKey(0)
    pkey, ekey, dkey = jax.random.split(key, 3)

    params = init_params(pkey, input_dim, output_dim, max_len, dim_model,
                         num_heads, num_layers, ff_hidden)

    enc_tokens = jax.random.randint(ekey, (batch, seq_enc), 0, input_dim, dtype=jnp.int32)
    dec_tokens = jax.random.randint(dkey, (batch, seq_dec), 0, output_dim, dtype=jnp.int32)

    fwd = jax.jit(functools.partial(transformer_forward,
                                    num_heads=num_heads, output_dim=output_dim))
    logits = fwd(params, enc_tokens, dec_tokens)
    jax.block_until_ready(logits)

    assert logits.shape == (batch, seq_dec, output_dim), logits.shape
    assert jnp.all(jnp.isfinite(logits))
    print("KERNEL_OK")
</pallas_src>

<mosaic_0001>
module attributes {stable_mosaic.version = 11 : i64} {
  func.func @_linear_kernel(%arg0: i32, %arg1: memref<16x32xf32, #tpu.memory_space<vmem>>, %arg2: memref<32x96xbf16, #tpu.memory_space<vmem>>, %arg3: memref<1x96xf32, #tpu.memory_space<vmem>>, %arg4: memref<16x96xbf16, #tpu.memory_space<vmem>>) attributes {dimension_semantics = [#tpu.dimension_semantics<parallel>], iteration_bounds = array<i64: 1>, scalar_prefetch = 0 : i64, scratch_operands = 0 : i64, tpu.core_type = #tpu.core_type<tc>, window_params = [{transform_indices = @transform_0, window_bounds = array<i64: 16, 32>}, {pipeline_mode = #tpu.pipeline_mode<synchronous>, transform_indices = @transform_1, window_bounds = array<i64: 32, 96>}, {pipeline_mode = #tpu.pipeline_mode<synchronous>, transform_indices = @transform_2, window_bounds = array<i64: 1, 96>}, {transform_indices = @transform_3, window_bounds = array<i64: 16, 96>}]} {
    %c0 = arith.constant 0 : index
    %c0_0 = arith.constant 0 : index
    %0 = vector.load %arg1[%c0, %c0_0] : memref<16x32xf32, #tpu.memory_space<vmem>>, vector<16x32xf32>
    %1 = arith.truncf %0 : vector<16x32xf32> to vector<16x32xbf16>
    %c0_1 = arith.constant 0 : index
    %c0_2 = arith.constant 0 : index
    %2 = vector.load %arg2[%c0_1, %c0_2] : memref<32x96xbf16, #tpu.memory_space<vmem>>, vector<32x96xbf16>
    %cst = arith.constant dense<0.000000e+00> : vector<16x96xf32>
    %3 = tpu.matmul %1, %2, %cst {dimension_numbers = #tpu.dot_dimension_numbers<[1], [0], [0], [1], [0, 0, 1, 1], [], []>} : vector<16x32xbf16>, vector<32x96xbf16>, vector<16x96xf32> -> vector<16x96xf32>
    %c0_3 = arith.constant 0 : index
    %c0_4 = arith.constant 0 : index
    %4 = vector.load %arg3[%c0_3, %c0_4] : memref<1x96xf32, #tpu.memory_space<vmem>>, vector<1x96xf32>
    %5 = vector.broadcast %4 : vector<1x96xf32> to vector<16x96xf32>
    %6 = arith.addf %3, %5 : vector<16x96xf32>
    %7 = arith.truncf %6 : vector<16x96xf32> to vector<16x96xbf16>
    %c0_5 = arith.constant 0 : index
    %c0_6 = arith.constant 0 : index
    %8 = vector.load %arg4[%c0_5, %c0_6] : memref<16x96xbf16, #tpu.memory_space<vmem>>, vector<16x96xbf16>
    tpu.vector_store %arg4[%c0_5, %c0_6], %7 {strides = array<i32>} : memref<16x96xbf16, #tpu.memory_space<vmem>>, vector<16x96xbf16>,
    return
  }
  func.func @transform_0(%arg0: i32) -> (i32, i32) {
    %c0_i32 = arith.constant 0 : i32
    %c0_i32_0 = arith.constant 0 : i32
    return %arg0, %c0_i32 : i32, i32
  }
  func.func @transform_1(%arg0: i32) -> (i32, i32) {
    %c0_i32 = arith.constant 0 : i32
    %c0_i32_0 = arith.constant 0 : i32
    %c0_i32_1 = arith.constant 0 : i32
    return %c0_i32, %c0_i32_0 : i32, i32
  }
  func.func @transform_2(%arg0: i32) -> (i32, i32) {
    %c0_i32 = arith.constant 0 : i32
    %c0_i32_0 = arith.constant 0 : i32
    %c0_i32_1 = arith.constant 0 : i32
    return %c0_i32, %c0_i32_0 : i32, i32
  }
  func.func @transform_3(%arg0: i32) -> (i32, i32) {
    %c0_i32 = arith.constant 0 : i32
    %c0_i32_0 = arith.constant 0 : i32
    return %arg0, %c0_i32 : i32, i32
  }
}

module attributes {stable_mosaic.version = 11 : i64} {
  func.func @_attn_kernel(%arg0: memref<8x8x8xbf16, #tpu.memory_space<vmem>>, %arg1: memref<8x8x8xbf16, #tpu.memory_space<vmem>>, %arg2: memref<8x8x8xbf16, #tpu.memory_space<vmem>>, %arg3: memref<8x8x8xbf16, #tpu.memory_space<vmem>>) attributes {dimension_semantics = [], scalar_prefetch = 0 : i64, scratch_operands = 0 : i64, tpu.core_type = #tpu.core_type<tc>} {
    %c0 = arith.constant 0 : index
    %c0_0 = arith.constant 0 : index
    %c0_1 = arith.constant 0 : index
    %0 = vector.load %arg0[%c0, %c0_0, %c0_1] : memref<8x8x8xbf16, #tpu.memory_space<vmem>>, vector<8x8x8xbf16>
    %c0_2 = arith.constant 0 : index
    %c0_3 = arith.constant 0 : index
    %c0_4 = arith.constant 0 : index
    %1 = vector.load %arg1[%c0_2, %c0_3, %c0_4] : memref<8x8x8xbf16, #tpu.memory_space<vmem>>, vector<8x8x8xbf16>
    %c0_5 = arith.constant 0 : index
    %c0_6 = arith.constant 0 : index
    %c0_7 = arith.constant 0 : index
    %2 = vector.load %arg2[%c0_5, %c0_6, %c0_7] : memref<8x8x8xbf16, #tpu.memory_space<vmem>>, vector<8x8x8xbf16>
    "tpu.trace_start"() <{level = 10 : i32, message = "bqd,bkd->bqk"}> : () -> ()
    %cst = arith.constant dense<0.000000e+00> : vector<8x8x8xf32>
    %3 = tpu.matmul %0, %1, %cst {dimension_numbers = #tpu.dot_dimension_numbers<[2], [2], [1], [1], [0, 0, 0, 1, 1, 1], [0], [0]>} : vector<8x8x8xbf16>, vector<8x8x8xbf16>, vector<8x8x8xf32> -> vector<8x8x8xf32>
    "tpu.trace_stop"() : () -> ()
    %cst_8 = arith.constant 0.353553385 : f32
    %4 = vector.broadcast %cst_8 : f32 to vector<8x8x8xf32>
    %5 = arith.mulf %3, %4 : vector<8x8x8xf32>
    %cst_9 = arith.constant dense<0xFF800000> : vector<8x8xf32>
    %6 = vector.multi_reduction <maximumf>, %5, %cst_9 [2] : vector<8x8x8xf32> to vector<8x8xf32>
    %7 = vector.shape_cast %6 : vector<8x8xf32> to vector<8x8x1xf32>
    %8 = vector.broadcast %7 : vector<8x8x1xf32> to vector<8x8x8xf32>
    %9 = arith.subf %5, %8 : vector<8x8x8xf32>
    %10 = math.exp %9 : vector<8x8x8xf32>
    %cst_10 = arith.constant dense<0.000000e+00> : vector<8x8xf32>
    %11 = vector.multi_reduction <add>, %10, %cst_10 [2] : vector<8x8x8xf32> to vector<8x8xf32>
    %12 = vector.shape_cast %11 : vector<8x8xf32> to vector<8x8x1xf32>
    %13 = tpu.reciprocal %12 {approx = true} : vector<8x8x1xf32> -> vector<8x8x1xf32>
    %14 = vector.broadcast %13 : vector<8x8x1xf32> to vector<8x8x8xf32>
    %15 = arith.mulf %10, %14 : vector<8x8x8xf32>
    %16 = arith.truncf %15 : vector<8x8x8xf32> to vector<8x8x8xbf16>
    "tpu.trace_start"() <{level = 10 : i32, message = "bqk,bkd->bqd"}> : () -> ()
    %cst_11 = arith.constant dense<0.000000e+00> : vector<8x8x8xf32>
    %17 = tpu.matmul %16, %2, %cst_11 {dimension_numbers = #tpu.dot_dimension_numbers<[2], [1], [1], [2], [0, 0, 0, 1, 1, 2], [0], [0]>} : vector<8x8x8xbf16>, vector<8x8x8xbf16>, vector<8x8x8xf32> -> vector<8x8x8xf32>
    "tpu.trace_stop"() : () -> ()
    %18 = arith.truncf %17 : vector<8x8x8xf32> to vector<8x8x8xbf16>
    %c0_12 = arith.constant 0 : index
    %c0_13 = arith.constant 0 : index
    %c0_14 = arith.constant 0 : index
    %19 = vector.load %arg3[%c0_12, %c0_13, %c0_14] : memref<8x8x8xbf16, #tpu.memory_space<vmem>>, vector<8x8x8xbf16>
    tpu.vector_store %arg3[%c0_12, %c0_13, %c0_14], %18 {strides = array<i32>} : memref<8x8x8xbf16, #tpu.memory_space<vmem>>, vector<8x8x8xbf16>,
    return
  }
}

module attributes {stable_mosaic.version = 11 : i64} {
  func.func @_proj_add_ln_kernel(%arg0: i32, %arg1: memref<16x32xbf16, #tpu.memory_space<vmem>>, %arg2: memref<16x32xf32, #tpu.memory_space<vmem>>, %arg3: memref<32x32xbf16, #tpu.memory_space<vmem>>, %arg4: memref<1x32xf32, #tpu.memory_space<vmem>>, %arg5: memref<1x32xf32, #tpu.memory_space<vmem>>, %arg6: memref<1x32xf32, #tpu.memory_space<vmem>>, %arg7: memref<16x32xf32, #tpu.memory_space<vmem>>) attributes {dimension_semantics = [#tpu.dimension_semantics<parallel>], iteration_bounds = array<i64: 1>, scalar_prefetch = 0 : i64, scratch_operands = 0 : i64, tpu.core_type = #tpu.core_type<tc>, window_params = [{transform_indices = @transform_0, window_bounds = array<i64: 16, 32>}, {transform_indices = @transform_1, window_bounds = array<i64: 16, 32>}, {pipeline_mode = #tpu.pipeline_mode<synchronous>, transform_indices = @transform_2, window_bounds = array<i64: 32, 32>}, {pipeline_mode = #tpu.pipeline_mode<synchronous>, transform_indices = @transform_3, window_bounds = array<i64: 1, 32>}, {pipeline_mode = #tpu.pipeline_mode<synchronous>, transform_indices = @transform_4, window_bounds = array<i64: 1, 32>}, {pipeline_mode = #tpu.pipeline_mode<synchronous>, transform_indices = @transform_5, window_bounds = array<i64: 1, 32>}, {transform_indices = @transform_6, window_bounds = array<i64: 16, 32>}]} {
    %c0 = arith.constant 0 : index
    %c0_0 = arith.constant 0 : index
    %0 = vector.load %arg1[%c0, %c0_0] : memref<16x32xbf16, #tpu.memory_space<vmem>>, vector<16x32xbf16>
    %c0_1 = arith.constant 0 : index
    %c0_2 = arith.constant 0 : index
    %1 = vector.load %arg3[%c0_1, %c0_2] : memref<32x32xbf16, #tpu.memory_space<vmem>>, vector<32x32xbf16>
    %cst = arith.constant dense<0.000000e+00> : vector<16x32xf32>
    %2 = tpu.matmul %0, %1, %cst {dimension_numbers = #tpu.dot_dimension_numbers<[1], [0], [0], [1], [0, 0, 1, 1], [], []>} : vector<16x32xbf16>, vector<32x32xbf16>, vector<16x32xf32> -> vector<16x32xf32>
    %c0_3 = arith.constant 0 : index
    %c0_4 = arith.constant 0 : index
    %3 = vector.load %arg4[%c0_3, %c0_4] : memref<1x32xf32, #tpu.memory_space<vmem>>, vector<1x32xf32>
    %4 = vector.broadcast %3 : vector<1x32xf32> to vector<16x32xf32>
    %5 = arith.addf %2, %4 : vector<16x32xf32>
    %c0_5 = arith.constant 0 : index
    %c0_6 = arith.constant 0 : index
    %6 = vector.load %arg2[%c0_5, %c0_6] : memref<16x32xf32, #tpu.memory_space<vmem>>, vector<16x32xf32>
    %7 = arith.addf %5, %6 : vector<16x32xf32>
    %cst_7 = arith.constant dense<0.000000e+00> : vector<16xf32>
    %8 = vector.multi_reduction <add>, %7, %cst_7 [1] : vector<16x32xf32> to vector<16xf32>
    %9 = vector.shape_cast %8 : vector<16xf32> to vector<16x1xf32>
    %cst_8 = arith.constant 3.200000e+01 : f32
    %10 = vector.broadcast %cst_8 : f32 to vector<16x1xf32>
    %11 = arith.divf %9, %10 : vector<16x1xf32>
    %12 = vector.broadcast %11 : vector<16x1xf32> to vector<16x32xf32>
    %13 = arith.subf %7, %12 : vector<16x32xf32>
    %14 = arith.mulf %13, %13 : vector<16x32xf32>
    %cst_9 = arith.constant dense<0.000000e+00> : vector<16xf32>
    %15 = vector.multi_reduction <add>, %14, %cst_9 [1] : vector<16x32xf32> to vector<16xf32>
    %16 = vector.shape_cast %15 : vector<16xf32> to vector<16x1xf32>
    %cst_10 = arith.constant 3.200000e+01 : f32
    %17 = vector.broadcast %cst_10 : f32 to vector<16x1xf32>
    %18 = arith.divf %16, %17 : vector<16x1xf32>
    %19 = vector.broadcast %11 : vector<16x1xf32> to vector<16x32xf32>
    %20 = arith.subf %7, %19 : vector<16x32xf32>
    %cst_11 = arith.constant 9.99999974E-6 : f32
    %21 = vector.broadcast %cst_11 : f32 to vector<16x1xf32>
    %22 = arith.addf %18, %21 : vector<16x1xf32>
    %23 = math.rsqrt %22 : vector<16x1xf32>
    %24 = vector.broadcast %23 : vector<16x1xf32> to vector<16x32xf32>
    %25 = arith.mulf %20, %24 : vector<16x32xf32>
    %c0_12 = arith.constant 0 : index
    %c0_13 = arith.constant 0 : index
    %26 = vector.load %arg5[%c0_12, %c0_13] : memref<1x32xf32, #tpu.memory_space<vmem>>, vector<1x32xf32>
    %27 = vector.broadcast %26 : vector<1x32xf32> to vector<16x32xf32>
    %28 = arith.mulf %25, %27 : vector<16x32xf32>
    %c0_14 = arith.constant 0 : index
    %c0_15 = arith.constant 0 : index
    %29 = vector.load %arg6[%c0_14, %c0_15] : memref<1x32xf32, #tpu.memory_space<vmem>>, vector<1x32xf32>
    %30 = vector.broadcast %29 : vector<1x32xf32> to vector<16x32xf32>
    %31 = arith.addf %28, %30 : vector<16x32xf32>
    %c0_16 = arith.constant 0 : index
    %c0_17 = arith.constant 0 : index
    %32 = vector.load %arg7[%c0_16, %c0_17] : memref<16x32xf32, #tpu.memory_space<vmem>>, vector<16x32xf32>
    tpu.vector_store %arg7[%c0_16, %c0_17], %31 {strides = array<i32>} : memref<16x32xf32, #tpu.memory_space<vmem>>, vector<16x32xf32>,
    return
  }
  func.func @transform_0(%arg0: i32) -> (i32, i32) {
    %c0_i32 = arith.constant 0 : i32
    %c0_i32_0 = arith.constant 0 : i32
    return %arg0, %c0_i32 : i32, i32
  }
  func.func @transform_1(%arg0: i32) -> (i32, i32) {
    %c0_i32 = arith.constant 0 : i32
    %c0_i32_0 = arith.constant 0 : i32
    return %arg0, %c0_i32 : i32, i32
  }
  func.func @transform_2(%arg0: i32) -> (i32, i32) {
    %c0_i32 = arith.constant 0 : i32
    %c0_i32_0 = arith.constant 0 : i32
    %c0_i32_1 = arith.constant 0 : i32
    return %c0_i32, %c0_i32_0 : i32, i32
  }
  func.func @transform_3(%arg0: i32) -> (i32, i32) {
    %c0_i32 = arith.constant 0 : i32
    %c0_i32_0 = arith.constant 0 : i32
    %c0_i32_1 = arith.constant 0 : i32
    return %c0_i32, %c0_i32_0 : i32, i32
  }
  func.func @transform_4(%arg0: i32) -> (i32, i32) {
    %c0_i32 = arith.constant 0 : i32
    %c0_i32_0 = arith.constant 0 : i32
    %c0_i32_1 = arith.constant 0 : i32
    return %c0_i32, %c0_i32_0 : i32, i32
  }
  func.func @transform_5(%arg0: i32) -> (i32, i32) {
    %c0_i32 = arith.constant 0 : i32
    %c0_i32_0 = arith.constant 0 : i32
    %c0_i32_1 = arith.constant 0 : i32
    return %c0_i32, %c0_i32_0 : i32, i32
  }
  func.func @transform_6(%arg0: i32) -> (i32, i32) {
    %c0_i32 = arith.constant 0 : i32
    %c0_i32_0 = arith.constant 0 : i32
    return %arg0, %c0_i32 : i32, i32
  }
}

module attributes {stable_mosaic.version = 11 : i64} {
  func.func @_ffn_add_ln_kernel(%arg0: i32, %arg1: memref<16x32xf32, #tpu.memory_space<vmem>>, %arg2: memref<32x64xbf16, #tpu.memory_space<vmem>>, %arg3: memref<1x64xf32, #tpu.memory_space<vmem>>, %arg4: memref<64x32xbf16, #tpu.memory_space<vmem>>, %arg5: memref<1x32xf32, #tpu.memory_space<vmem>>, %arg6: memref<1x32xf32, #tpu.memory_space<vmem>>, %arg7: memref<1x32xf32, #tpu.memory_space<vmem>>, %arg8: memref<16x32xf32, #tpu.memory_space<vmem>>) attributes {dimension_semantics = [#tpu.dimension_semantics<parallel>], iteration_bounds = array<i64: 1>, scalar_prefetch = 0 : i64, scratch_operands = 0 : i64, tpu.core_type = #tpu.core_type<tc>, window_params = [{transform_indices = @transform_0, window_bounds = array<i64: 16, 32>}, {pipeline_mode = #tpu.pipeline_mode<synchronous>, transform_indices = @transform_1, window_bounds = array<i64: 32, 64>}, {pipeline_mode = #tpu.pipeline_mode<synchronous>, transform_indices = @transform_2, window_bounds = array<i64: 1, 64>}, {pipeline_mode = #tpu.pipeline_mode<synchronous>, transform_indices = @transform_3, window_bounds = array<i64: 64, 32>}, {pipeline_mode = #tpu.pipeline_mode<synchronous>, transform_indices = @transform_4, window_bounds = array<i64: 1, 32>}, {pipeline_mode = #tpu.pipeline_mode<synchronous>, transform_indices = @transform_5, window_bounds = array<i64: 1, 32>}, {pipeline_mode = #tpu.pipeline_mode<synchronous>, transform_indices = @transform_6, window_bounds = array<i64: 1, 32>}, {transform_indices = @transform_7, window_bounds = array<i64: 16, 32>}]} {
    %c0 = arith.constant 0 : index
    %c0_0 = arith.constant 0 : index
    %0 = vector.load %arg1[%c0, %c0_0] : memref<16x32xf32, #tpu.memory_space<vmem>>, vector<16x32xf32>
    %1 = arith.truncf %0 : vector<16x32xf32> to vector<16x32xbf16>
    %c0_1 = arith.constant 0 : index
    %c0_2 = arith.constant 0 : index
    %2 = vector.load %arg2[%c0_1, %c0_2] : memref<32x64xbf16, #tpu.memory_space<vmem>>, vector<32x64xbf16>
    %cst = arith.constant dense<0.000000e+00> : vector<16x64xf32>
    %3 = tpu.matmul %1, %2, %cst {dimension_numbers = #tpu.dot_dimension_numbers<[1], [0], [0], [1], [0, 0, 1, 1], [], []>} : vector<16x32xbf16>, vector<32x64xbf16>, vector<16x64xf32> -> vector<16x64xf32>
    %c0_3 = arith.constant 0 : index
    %c0_4 = arith.constant 0 : index
    %4 = vector.load %arg3[%c0_3, %c0_4] : memref<1x64xf32, #tpu.memory_space<vmem>>, vector<1x64xf32>
    %5 = vector.broadcast %4 : vector<1x64xf32> to vector<16x64xf32>
    %6 = arith.addf %3, %5 : vector<16x64xf32>
    %cst_5 = arith.constant 0.000000e+00 : f32
    %7 = vector.broadcast %cst_5 : f32 to vector<16x64xf32>
    %8 = arith.maximumf %6, %7 : vector<16x64xf32>
    %9 = arith.truncf %8 : vector<16x64xf32> to vector<16x64xbf16>
    %c0_6 = arith.constant 0 : index
    %c0_7 = arith.constant 0 : index
    %10 = vector.load %arg4[%c0_6, %c0_7] : memref<64x32xbf16, #tpu.memory_space<vmem>>, vector<64x32xbf16>
    %cst_8 = arith.constant dense<0.000000e+00> : vector<16x32xf32>
    %11 = tpu.matmul %9, %10, %cst_8 {dimension_numbers = #tpu.dot_dimension_numbers<[1], [0], [0], [1], [0, 0, 1, 1], [], []>} : vector<16x64xbf16>, vector<64x32xbf16>, vector<16x32xf32> -> vector<16x32xf32>
    %c0_9 = arith.constant 0 : index
    %c0_10 = arith.constant 0 : index
    %12 = vector.load %arg5[%c0_9, %c0_10] : memref<1x32xf32, #tpu.memory_space<vmem>>, vector<1x32xf32>
    %13 = vector.broadcast %12 : vector<1x32xf32> to vector<16x32xf32>
    %14 = arith.addf %11, %13 : vector<16x32xf32>
    %15 = arith.addf %14, %0 : vector<16x32xf32>
    %cst_11 = arith.constant dense<0.000000e+00> : vector<16xf32>
    %16 = vector.multi_reduction <add>, %15, %cst_11 [1] : vector<16x32xf32> to vector<16xf32>
    %17 = vector.shape_cast %16 : vector<16xf32> to vector<16x1xf32>
    %cst_12 = arith.constant 3.200000e+01 : f32
    %18 = vector.broadcast %cst_12 : f32 to vector<16x1xf32>
    %19 = arith.divf %17, %18 : vector<16x1xf32>
    %20 = vector.broadcast %19 : vector<16x1xf32> to vector<16x32xf32>
    %21 = arith.subf %15, %20 : vector<16x32xf32>
    %22 = arith.mulf %21, %21 : vector<16x32xf32>
    %cst_13 = arith.constant dense<0.000000e+00> : vector<16xf32>
    %23 = vector.multi_reduction <add>, %22, %cst_13 [1] : vector<16x32xf32> to vector<16xf32>
    %24 = vector.shape_cast %23 : vector<16xf32> to vector<16x1xf32>
    %cst_14 = arith.constant 3.200000e+01 : f32
    %25 = vector.broadcast %cst_14 : f32 to vector<16x1xf32>
    %26 = arith.divf %24, %25 : vector<16x1xf32>
    %27 = vector.broadcast %19 : vector<16x1xf32> to vector<16x32xf32>
    %28 = arith.subf %15, %27 : vector<16x32xf32>
    %cst_15 = arith.constant 9.99999974E-6 : f32
    %29 = vector.broadcast %cst_15 : f32 to vector<16x1xf32>
    %30 = arith.addf %26, %29 : vector<16x1xf32>
    %31 = math.rsqrt %30 : vector<16x1xf32>
    %32 = vector.broadcast %31 : vector<16x1xf32> to vector<16x32xf32>
    %33 = arith.mulf %28, %32 : vector<16x32xf32>
    %c0_16 = arith.constant 0 : index
    %c0_17 = arith.constant 0 : index
    %34 = vector.load %arg6[%c0_16, %c0_17] : memref<1x32xf32, #tpu.memory_space<vmem>>, vector<1x32xf32>
    %35 = vector.broadcast %34 : vector<1x32xf32> to vector<16x32xf32>
    %36 = arith.mulf %33, %35 : vector<16x32xf32>
    %c0_18 = arith.constant 0 : index
    %c0_19 = arith.constant 0 : index
    %37 = vector.load %arg7[%c0_18, %c0_19] : memref<1x32xf32, #tpu.memory_space<vmem>>, vector<1x32xf32>
    %38 = vector.broadcast %37 : vector<1x32xf32> to vector<16x32xf32>
    %39 = arith.addf %36, %38 : vector<16x32xf32>
    %c0_20 = arith.constant 0 : index
    %c0_21 = arith.constant 0 : index
    %40 = vector.load %arg8[%c0_20, %c0_21] : memref<16x32xf32, #tpu.memory_space<vmem>>, vector<16x32xf32>
    tpu.vector_store %arg8[%c0_20, %c0_21], %39 {strides = array<i32>} : memref<16x32xf32, #tpu.memory_space<vmem>>, vector<16x32xf32>,
    return
  }
  func.func @transform_0(%arg0: i32) -> (i32, i32) {
    %c0_i32 = arith.constant 0 : i32
    %c0_i32_0 = arith.constant 0 : i32
    return %arg0, %c0_i32 : i32, i32
  }
  func.func @transform_1(%arg0: i32) -> (i32, i32) {
    %c0_i32 = arith.constant 0 : i32
    %c0_i32_0 = arith.constant 0 : i32
    %c0_i32_1 = arith.constant 0 : i32
    return %c0_i32, %c0_i32_0 : i32, i32
  }
  func.func @transform_2(%arg0: i32) -> (i32, i32) {
    %c0_i32 = arith.constant 0 : i32
    %c0_i32_0 = arith.constant 0 : i32
    %c0_i32_1 = arith.constant 0 : i32
    return %c0_i32, %c0_i32_0 : i32, i32
  }
  func.func @transform_3(%arg0: i32) -> (i32, i32) {
    %c0_i32 = arith.constant 0 : i32
    %c0_i32_0 = arith.constant 0 : i32
    %c0_i32_1 = arith.constant 0 : i32
    return %c0_i32, %c0_i32_0 : i32, i32
  }
  func.func @transform_4(%arg0: i32) -> (i32, i32) {
    %c0_i32 = arith.constant 0 : i32
    %c0_i32_0 = arith.constant 0 : i32
    %c0_i32_1 = arith.constant 0 : i32
    return %c0_i32, %c0_i32_0 : i32, i32
  }
  func.func @transform_5(%arg0: i32) -> (i32, i32) {
    %c0_i32 = arith.constant 0 : i32
    %c0_i32_0 = arith.constant 0 : i32
    %c0_i32_1 = arith.constant 0 : i32
    return %c0_i32, %c0_i32_0 : i32, i32
  }
  func.func @transform_6(%arg0: i32) -> (i32, i32) {
    %c0_i32 = arith.constant 0 : i32
    %c0_i32_0 = arith.constant 0 : i32
    %c0_i32_1 = arith.constant 0 : i32
    return %c0_i32, %c0_i32_0 : i32, i32
  }
  func.func @transform_7(%arg0: i32) -> (i32, i32) {
    %c0_i32 = arith.constant 0 : i32
    %c0_i32_0 = arith.constant 0 : i32
    return %arg0, %c0_i32 : i32, i32
  }
}

module attributes {stable_mosaic.version = 11 : i64} {
  func.func @_cross_proj_kernel(%arg0: memref<16x32xf32, #tpu.memory_space<vmem>>, %arg1: memref<16x32xf32, #tpu.memory_space<vmem>>, %arg2: memref<32x32xbf16, #tpu.memory_space<vmem>>, %arg3: memref<1x32xf32, #tpu.memory_space<vmem>>, %arg4: memref<32x64xbf16, #tpu.memory_space<vmem>>, %arg5: memref<1x64xf32, #tpu.memory_space<vmem>>, %arg6: memref<16x32xbf16, #tpu.memory_space<vmem>>, %arg7: memref<16x64xbf16, #tpu.memory_space<vmem>>) attributes {dimension_semantics = [], scalar_prefetch = 0 : i64, scratch_operands = 0 : i64, tpu.core_type = #tpu.core_type<tc>} {
    %c0 = arith.constant 0 : index
    %c0_0 = arith.constant 0 : index
    %0 = vector.load %arg0[%c0, %c0_0] : memref<16x32xf32, #tpu.memory_space<vmem>>, vector<16x32xf32>
    %1 = arith.truncf %0 : vector<16x32xf32> to vector<16x32xbf16>
    %c0_1 = arith.constant 0 : index
    %c0_2 = arith.constant 0 : index
    %2 = vector.load %arg1[%c0_1, %c0_2] : memref<16x32xf32, #tpu.memory_space<vmem>>, vector<16x32xf32>
    %3 = arith.truncf %2 : vector<16x32xf32> to vector<16x32xbf16>
    %c0_3 = arith.constant 0 : index
    %c0_4 = arith.constant 0 : index
    %4 = vector.load %arg2[%c0_3, %c0_4] : memref<32x32xbf16, #tpu.memory_space<vmem>>, vector<32x32xbf16>
    %cst = arith.constant dense<0.000000e+00> : vector<16x32xf32>
    %5 = tpu.matmul %1, %4, %cst {dimension_numbers = #tpu.dot_dimension_numbers<[1], [0], [0], [1], [0, 0, 1, 1], [], []>} : vector<16x32xbf16>, vector<32x32xbf16>, vector<16x32xf32> -> vector<16x32xf32>
    %c0_5 = arith.constant 0 : index
    %c0_6 = arith.constant 0 : index
    %6 = vector.load %arg3[%c0_5, %c0_6] : memref<1x32xf32, #tpu.memory_space<vmem>>, vector<1x32xf32>
    %7 = vector.broadcast %6 : vector<1x32xf32> to vector<16x32xf32>
    %8 = arith.addf %5, %7 : vector<16x32xf32>
    %9 = arith.truncf %8 : vector<16x32xf32> to vector<16x32xbf16>
    %c0_7 = arith.constant 0 : index
    %c0_8 = arith.constant 0 : index
    %10 = vector.load %arg6[%c0_7, %c0_8] : memref<16x32xbf16, #tpu.memory_space<vmem>>, vector<16x32xbf16>
    tpu.vector_store %arg6[%c0_7, %c0_8], %9 {strides = array<i32>} : memref<16x32xbf16, #tpu.memory_space<vmem>>, vector<16x32xbf16>,
    %c0_9 = arith.constant 0 : index
    %c0_10 = arith.constant 0 : index
    %11 = vector.load %arg4[%c0_9, %c0_10] : memref<32x64xbf16, #tpu.memory_space<vmem>>, vector<32x64xbf16>
    %cst_11 = arith.constant dense<0.000000e+00> : vector<16x64xf32>
    %12 = tpu.matmul %3, %11, %cst_11 {dimension_numbers = #tpu.dot_dimension_numbers<[1], [0], [0], [1], [0, 0, 1, 1], [], []>} : vector<16x32xbf16>, vector<32x64xbf16>, vector<16x64xf32> -> vector<16x64xf32>
    %c0_12 = arith.constant 0 : index
    %c0_13 = arith.constant 0 : index
    %13 = vector.load %arg5[%c0_12, %c0_13] : memref<1x64xf32, #tpu.memory_space<vmem>>, vector<1x64xf32>
    %14 = vector.broadcast %13 : vector<1x64xf32> to vector<16x64xf32>
    %15 = arith.addf %12, %14 : vector<16x64xf32>
    %16 = arith.truncf %15 : vector<16x64xf32> to vector<16x64xbf16>
    %c0_14 = arith.constant 0 : index
    %c0_15 = arith.constant 0 : index
    %17 = vector.load %arg7[%c0_14, %c0_15] : memref<16x64xbf16, #tpu.memory_space<vmem>>, vector<16x64xbf16>
    tpu.vector_store %arg7[%c0_14, %c0_15], %16 {strides = array<i32>} : memref<16x64xbf16, #tpu.memory_space<vmem>>, vector<16x64xbf16>,
    return
  }
}

module attributes {stable_mosaic.version = 11 : i64} {
  func.func @_linear_kernel(%arg0: i32, %arg1: memref<16x32xf32, #tpu.memory_space<vmem>>, %arg2: memref<32x128xbf16, #tpu.memory_space<vmem>>, %arg3: memref<1x128xf32, #tpu.memory_space<vmem>>, %arg4: memref<16x128xf32, #tpu.memory_space<vmem>>) attributes {dimension_semantics = [#tpu.dimension_semantics<parallel>], iteration_bounds = array<i64: 1>, scalar_prefetch = 0 : i64, scratch_operands = 0 : i64, tpu.core_type = #tpu.core_type<tc>, window_params = [{transform_indices = @transform_0, window_bounds = array<i64: 16, 32>}, {pipeline_mode = #tpu.pipeline_mode<synchronous>, transform_indices = @transform_1, window_bounds = array<i64: 32, 128>}, {pipeline_mode = #tpu.pipeline_mode<synchronous>, transform_indices = @transform_2, window_bounds = array<i64: 1, 128>}, {transform_indices = @transform_3, window_bounds = array<i64: 16, 128>}]} {
    %c0 = arith.constant 0 : index
    %c0_0 = arith.constant 0 : index
    %0 = vector.load %arg1[%c0, %c0_0] : memref<16x32xf32, #tpu.memory_space<vmem>>, vector<16x32xf32>
    %1 = arith.truncf %0 : vector<16x32xf32> to vector<16x32xbf16>
    %c0_1 = arith.constant 0 : index
    %c0_2 = arith.constant 0 : index
    %2 = vector.load %arg2[%c0_1, %c0_2] : memref<32x128xbf16, #tpu.memory_space<vmem>>, vector<32x128xbf16>
    %cst = arith.constant dense<0.000000e+00> : vector<16x128xf32>
    %3 = tpu.matmul %1, %2, %cst {dimension_numbers = #tpu.dot_dimension_numbers<[1], [0], [0], [1], [0, 0, 1, 1], [], []>} : vector<16x32xbf16>, vector<32x128xbf16>, vector<16x128xf32> -> vector<16x128xf32>
    %c0_3 = arith.constant 0 : index
    %c0_4 = arith.constant 0 : index
    %4 = vector.load %arg3[%c0_3, %c0_4] : memref<1x128xf32, #tpu.memory_space<vmem>>, vector<1x128xf32>
    %5 = vector.broadcast %4 : vector<1x128xf32> to vector<16x128xf32>
    %6 = arith.addf %3, %5 : vector<16x128xf32>
    %c0_5 = arith.constant 0 : index
    %c0_6 = arith.constant 0 : index
    %7 = vector.load %arg4[%c0_5, %c0_6] : memref<16x128xf32, #tpu.memory_space<vmem>>, vector<16x128xf32>
    tpu.vector_store %arg4[%c0_5, %c0_6], %6 {strides = array<i32>} : memref<16x128xf32, #tpu.memory_space<vmem>>, vector<16x128xf32>,
    return
  }
  func.func @transform_0(%arg0: i32) -> (i32, i32) {
    %c0_i32 = arith.constant 0 : i32
    %c0_i32_0 = arith.constant 0 : i32
    return %arg0, %c0_i32 : i32, i32
  }
  func.func @transform_1(%arg0: i32) -> (i32, i32) {
    %c0_i32 = arith.constant 0 : i32
    %c0_i32_0 = arith.constant 0 : i32
    %c0_i32_1 = arith.constant 0 : i32
    return %c0_i32, %c0_i32_0 : i32, i32
  }
  func.func @transform_2(%arg0: i32) -> (i32, i32) {
    %c0_i32 = arith.constant 0 : i32
    %c0_i32_0 = arith.constant 0 : i32
    %c0_i32_1 = arith.constant 0 : i32
    return %c0_i32, %c0_i32_0 : i32, i32
  }
  func.func @transform_3(%arg0: i32) -> (i32, i32) {
    %c0_i32 = arith.constant 0 : i32
    %c0_i32_0 = arith.constant 0 : i32
    return %arg0, %c0_i32 : i32, i32
  }
}

</mosaic_0001>

<llo_original>
// kernel: transformer_forward.23
$region0: #{transformer_forward.23}
  #allocation0 [shape = 'u32[]', space=smem, size = 0x4, offset = 0x4, fixed_abs, tag = 'smem constant byte address 0x4 - core index']
  #allocation1 [shape = 'u32[144,128]{1,0:T(1,128)}', space=vmem, size = 0x12000, scoped, tag = 'internal scratch']
  %s0 = inlined_call_operand.vmem [shape: f32[16,32], index: 0, kind: input, shape index: {}]
  %s1 = inlined_call_operand.vmem [shape: bf16[32,96], index: 1, kind: input, shape index: {}]
  %s2 = inlined_call_operand.vmem [shape: f32[1,96], index: 2, kind: input, shape index: {}]
  %s3 = inlined_call_operand.vmem [shape: bf16[16,96], index: 3, kind: output, shape index: {}]
  %s4 = sld [smem:[#allocation0]]
  $region22: #{transformer_forward.23} parent=0
    _
  %s6 = ssub.s32 1, %s4
  %s7 = scalar_select 0, %s6, %s4
  // Predicated region
  $region2: #{transformer_forward.23} parent=0 // pred_check
    _
  $region3: #{transformer_forward.23} parent=0 // pred_check_branch
    %9 = sbr.rel (0) target = $region5
  $region4: #{transformer_forward.23} parent=0 // pred_region
    _
  $region5: #{transformer_forward.23} parent=0 // pred_fallthru
    _
  // Predicated region
  $region6: #{transformer_forward.23} parent=0 // pred_check
    _
  $region7: #{transformer_forward.23} parent=0 // pred_check_branch
    %11 = sbr.rel (0) target = $region9
  $region8: #{transformer_forward.23} parent=0 // pred_region
    _
  $region9: #{transformer_forward.23} parent=0 // pred_fallthru
    _
  // Predicated region
  $region10: #{transformer_forward.23} parent=0 // pred_check
    _
  $region11: #{transformer_forward.23} parent=0 // pred_check_branch
    %13 = sbr.rel (0) target = $region13
  $region12: #{transformer_forward.23} parent=0 // pred_region
    _
  $region13: #{transformer_forward.23} parent=0 // pred_fallthru
    _
  %v15 = vld [vmem:[%s0] sm:$0xff]
  %v16 = vld [vmem:[%s0 + $0x8] sm:$0xff]
  %v17 = vpack.c.bf16 %v16, %v15
  %v18 = vld [vmem:[%s1] sm:$0xf]
  %v19 = vld [vmem:[%s1 + $0x4] sm:$0xf]
  %v20 = vld [vmem:[%s1 + $0x8] sm:$0xf]
  %v21 = vld [vmem:[%s1 + $0xc] sm:$0xf]
  %v22 = vld [vmem:[%s2] sm:$0x1]
  %v24 = vlaneseq
  %v25 = vshrl.u32 %v24, 7
  %v26 = vsub.s32 0, %v25
  %v27 = vrot.slane %v22, %v26
  %v33 = vunpack.c.l.b16 %v18
  %v34 = vunpack.c.l.b16 %v19
  %v35 = vunpack.c.l.b16 %v20
  %v36 = vunpack.c.l.b16 %v21
  %v37 = vpack.c.b16 %v34, %v33
  %v38 = vpack.c.b16 %v36, %v35
  %vm41 = vcmask 261120
  %v43 = vsel %vm41, %v17, 0
  %45 = vmatprep.subr.bf16.mxu0 0
  %46 = vmatpush1.bf16.msra.mxu0 %v37
  %47 = vmatprep.subr.bf16.mxu0 0
  %48 = vmatpush1.bf16.msra.mxu0 %v38
  %49 = vmatprep.subr.bf16.mxu0 0
  %50 = vmatpush1.bf16.msra.mxu0 0
  %51 = vmatprep.subr.bf16.mxu0 0
  %52 = vmatpush1.bf16.msra.mxu0 0
  %53 = vmatprep.subr.bf16.mxu0 0
  %54 = vmatpush1.bf16.msra.mxu0 0
  %55 = vmatprep.subr.bf16.mxu0 0
  %56 = vmatpush1.bf16.msra.mxu0 0
  %57 = vmatprep.subr.bf16.mxu0 0
  %58 = vmatpush1.bf16.msra.mxu0 0
  %59 = vmatprep.subr.bf16.mxu0 0
  %60 = vmatpush1.bf16.msra.mxu0 0
  %61 = vmatprep.subr.bf16.mxu0 0
  %62 = vmatpush1.bf16.msra.mxu0 0
  %63 = vmatprep.subr.bf16.mxu0 0
  %64 = vmatpush1.bf16.msra.mxu0 0
  %65 = vmatprep.subr.bf16.mxu0 0
  %66 = vmatpush1.bf16.msra.mxu0 0
  %67 = vmatprep.subr.bf16.mxu0 0
  %68 = vmatpush1.bf16.msra.mxu0 0
  %69 = vmatprep.subr.bf16.mxu0 0
  %70 = vmatpush1.bf16.msra.mxu0 0
  %71 = vmatprep.subr.bf16.mxu0 0
  %72 = vmatpush1.bf16.msra.mxu0 0
  %73 = vmatprep.subr.bf16.mxu0 0
  %74 = vmatpush1.bf16.msra.mxu0 0
  %75 = vmatprep.subr.bf16.mxu0 0
  %76 = vmatpush1.bf16.msra.mxu0 0
  %77 = vmatprep.mubr.bf16.mxu0 0
  %78 = vmatmul.mubr.bf16.gmra.mrb[0].mxu0 %v43
  %v79 = vpop.f32.mrb[0].mxu0
  %v80 = vadd.f32 %v27, %v79
  %v81 = vpop.f32.mrb[0].mxu0
  %v82 = vpop.f32.mrb[0].mxu0
  %v83 = vadd.f32 %v27, %v82
  %v84 = vpop.f32.mrb[0].mxu0
  %85 = vdwg.mxu0
  %v86 = vpack.c.bf16 %v83, %v80
  %v88 = vunpack.c.l.b16 %v86
  %v89 = vunpack.c.h.b16 %v86
  %v90 = vpack.c.b16 %v88, %v88
  %v91 = vpack.c.b16 %v89, %v89
  %vm94 = vcmask 781312
  %95 = vst.msk [vmem:[%s3] sm:$0xf] %vm94, %v90
  %96 = vst.msk [vmem:[%s3 + $0x4] sm:$0xf] %vm94, %v91
  // Predicated region
  $region14: #{transformer_forward.23} parent=0 // pred_check
    _
  $region15: #{transformer_forward.23} parent=0 // pred_check_branch
    %98 = sbr.rel (0) target = $region17
  $region16: #{transformer_forward.23} parent=0 // pred_region
    _
  $region17: #{transformer_forward.23} parent=0 // pred_fallthru
    _
  // Predicated region
  $region18: #{transformer_forward.23} parent=0 // pred_check
    _
  $region19: #{transformer_forward.23} parent=0 // pred_check_branch
    %100 = sbr.rel (0) target = $region21
  $region20: #{transformer_forward.23} parent=0 // pred_region
    _
  $region21: #{transformer_forward.23} parent=0 // pred_fallthru
    _

// kernel: transformer_forward.24
$region0: #{transformer_forward.24}
  #allocation0 [shape = 'u32[]', space=smem, size = 0x4, offset = 0x4, fixed_abs, tag = 'smem constant byte address 0x4 - core index']
  #allocation1 [shape = 'u32[144,128]{1,0:T(1,128)}', space=vmem, size = 0x12000, scoped, tag = 'internal scratch']
  %s0 = inlined_call_operand.vmem [shape: bf16[8,8,8], index: 0, kind: input, shape index: {}]
  %s1 = inlined_call_operand.vmem [shape: bf16[8,8,8], index: 1, kind: input, shape index: {}]
  %s2 = inlined_call_operand.vmem [shape: bf16[8,8,8], index: 2, kind: input, shape index: {}]
  %s3 = inlined_call_operand.vmem [shape: bf16[8,8,8], index: 3, kind: output, shape index: {}]
  %s4 = sld [smem:[#allocation0]]
  $region22: #{transformer_forward.24} parent=0
    _
  %s6 = ssub.s32 1, %s4
  %s7 = scalar_select 0, %s6, %s4
  // Predicated region
  $region2: #{transformer_forward.24} parent=0 // pred_check
    _
  $region3: #{transformer_forward.24} parent=0 // pred_check_branch
    %9 = sbr.rel (0) target = $region5
  $region4: #{transformer_forward.24} parent=0 // pred_region
    _
  $region5: #{transformer_forward.24} parent=0 // pred_fallthru
    _
  // Predicated region
  $region6: #{transformer_forward.24} parent=0 // pred_check
    _
  $region7: #{transformer_forward.24} parent=0 // pred_check_branch
    %11 = sbr.rel (0) target = $region9
  $region8: #{transformer_forward.24} parent=0 // pred_region
    _
  $region9: #{transformer_forward.24} parent=0 // pred_fallthru
    _
  // Predicated region
  $region10: #{transformer_forward.24} parent=0 // pred_check
    _
  $region11: #{transformer_forward.24} parent=0 // pred_check_branch
    %13 = sbr.rel (0) target = $region13
  $region12: #{transformer_forward.24} parent=0 // pred_region
    _
  $region13: #{transformer_forward.24} parent=0 // pred_fallthru
    _
  %v15 = vld [vmem:[%s0] sm:$0xf]
  %v16 = vld [vmem:[%s0 + $0x4] sm:$0xf]
  %v17 = vld [vmem:[%s0 + $0x8] sm:$0xf]
  %v18 = vld [vmem:[%s0 + $0xc] sm:$0xf]
  %v19 = vld [vmem:[%s0 + $0x10] sm:$0xf]
  %v20 = vld [vmem:[%s0 + $0x14] sm:$0xf]
  %v21 = vld [vmem:[%s0 + $0x18] sm:$0xf]
  %v22 = vld [vmem:[%s0 + $0x1c] sm:$0xf]
  %v23 = vld [vmem:[%s1] sm:$0xf]
  %v24 = vld [vmem:[%s1 + $0x4] sm:$0xf]
  %v25 = vld [vmem:[%s1 + $0x8] sm:$0xf]
  %v26 = vld [vmem:[%s1 + $0xc] sm:$0xf]
  %v27 = vld [vmem:[%s1 + $0x10] sm:$0xf]
  %v28 = vld [vmem:[%s1 + $0x14] sm:$0xf]
  %v29 = vld [vmem:[%s1 + $0x18] sm:$0xf]
  %v30 = vld [vmem:[%s1 + $0x1c] sm:$0xf]
  %v31 = vld [vmem:[%s2] sm:$0xf]
  %v32 = vld [vmem:[%s2 + $0x4] sm:$0xf]
  %v33 = vld [vmem:[%s2 + $0x8] sm:$0xf]
  %v34 = vld [vmem:[%s2 + $0xc] sm:$0xf]
  %v35 = vld [vmem:[%s2 + $0x10] sm:$0xf]
  %v36 = vld [vmem:[%s2 + $0x14] sm:$0xf]
  %v37 = vld [vmem:[%s2 + $0x18] sm:$0xf]
  %v38 = vld [vmem:[%s2 + $0x1c] sm:$0xf]
  %vm39 = vcmask 64512
  %v41 = vsel %vm39, %v15, 0
  %v44 = vsel %vm39, %v23, 0
  %46 = vmatprep.subr.bf16.mxu0 0
  %47 = vmatpush1.bf16.xpose.msra.mxu0 %v44
  %48 = vmatprep.subr.bf16.mxu0 0
  %49 = vmatpush1.bf16.xpose.msra.mxu0 0
  %50 = vmatprep.subr.bf16.mxu0 0
  %51 = vmatpush1.bf16.xpose.msra.mxu0 0
  %52 = vmatprep.subr.bf16.mxu0 0
  %53 = vmatpush1.bf16.xpose.msra.mxu0 0
  %54 = vmatprep.subr.bf16.mxu0 0
  %55 = vmatpush1.bf16.xpose.msra.mxu0 0
  %56 = vmatprep.subr.bf16.mxu0 0
  %57 = vmatpush1.bf16.xpose.msra.mxu0 0
  %58 = vmatprep.subr.bf16.mxu0 0
  %59 = vmatpush1.bf16.xpose.msra.mxu0 0
  %60 = vmatprep.subr.bf16.mxu0 0
  %61 = vmatpush1.bf16.xpose.msra.mxu0 0
  %62 = vmatprep.subr.bf16.mxu0 0
  %63 = vmatpush1.bf16.xpose.msra.mxu0 0
  %64 = vmatprep.subr.bf16.mxu0 0
  %65 = vmatpush1.bf16.xpose.msra.mxu0 0
  %66 = vmatprep.subr.bf16.mxu0 0
  %67 = vmatpush1.bf16.xpose.msra.mxu0 0
  %68 = vmatprep.subr.bf16.mxu0 0
  %69 = vmatpush1.bf16.xpose.msra.mxu0 0
  %70 = vmatprep.subr.bf16.mxu0 0
  %71 = vmatpush1.bf16.xpose.msra.mxu0 0
  %72 = vmatprep.subr.bf16.mxu0 0
  %73 = vmatpush1.bf16.xpose.msra.mxu0 0
  %74 = vmatprep.subr.bf16.mxu0 0
  %75 = vmatpush1.bf16.xpose.msra.mxu0 0
  %76 = vmatprep.subr.bf16.mxu0 0
  %77 = vmatpush1.bf16.xpose.msra.mxu0 0
  %78 = vmatprep.mubr.bf16.mxu0 0
  %79 = vmatmul.mubr.bf16.gmra.mrb[0].mxu0 %v41
  %v80 = vpop.f32.mrb[0].mxu0
  %v81 = vadd.f32 0.0, %v80
  %v82 = vpop.f32.mrb[0].mxu0
  %v83 = vpop.f32.mrb[0].mxu0
  %v84 = vpop.f32.mrb[0].mxu0
  %85 = vdwg.mxu0
  %v87 = vsel %vm39, %v16, 0
  %v90 = vsel %vm39, %v24, 0
  %92 = vmatprep.subr.bf16.mxu0 0
  %93 = vmatpush1.bf16.xpose.msra.mxu0 %v90
  %94 = vmatprep.subr.bf16.mxu0 0
  %95 = vmatpush1.bf16.xpose.msra.mxu0 0
  %96 = vmatprep.subr.bf16.mxu0 0
  %97 = vmatpush1.bf16.xpose.msra.mxu0 0
  %98 = vmatprep.subr.bf16.mxu0 0
  %99 = vmatpush1.bf16.xpose.msra.mxu0 0
  %100 = vmatprep.subr.bf16.mxu0 0
  %101 = vmatpush1.bf16.xpose.msra.mxu0 0
  %102 = vmatprep.subr.bf16.mxu0 0
  %103 = vmatpush1.bf16.xpose.msra.mxu0 0
  %104 = vmatprep.subr.bf16.mxu0 0
  %105 = vmatpush1.bf16.xpose.msra.mxu0 0
  %106 = vmatprep.subr.bf16.mxu0 0
  %107 = vmatpush1.bf16.xpose.msra.mxu0 0
  %108 = vmatprep.subr.bf16.mxu0 0
  %109 = vmatpush1.bf16.xpose.msra.mxu0 0
  %110 = vmatprep.subr.bf16.mxu0 0
  %111 = vmatpush1.bf16.xpose.msra.mxu0 0
  %112 = vmatprep.subr.bf16.mxu0 0
  %113 = vmatpush1.bf16.xpose.msra.mxu0 0
  %114 = vmatprep.subr.bf16.mxu0 0
  %115 = vmatpush1.bf16.xpose.msra.mxu0 0
  %116 = vmatprep.subr.bf16.mxu0 0
  %117 = vmatpush1.bf16.xpose.msra.mxu0 0
  %118 = vmatprep.subr.bf16.mxu0 0
  %119 = vmatpush1.bf16.xpose.msra.mxu0 0
  %120 = vmatprep.subr.bf16.mxu0 0
  %121 = vmatpush1.bf16.xpose.msra.mxu0 0
  %122 = vmatprep.subr.bf16.mxu0 0
  %123 = vmatpush1.bf16.xpose.msra.mxu0 0
  %124 = vmatprep.mubr.bf16.mxu0 0
  %125 = vmatmul.mubr.bf16.gmra.mrb[0].mxu0 %v87
  %v126 = vpop.f32.mrb[0].mxu0
  %v127 = vadd.f32 0.0, %v126
  %v128 = vpop.f32.mrb[0].mxu0
  %v129 = vpop.f32.mrb[0].mxu0
  %v130 = vpop.f32.mrb[0].mxu0
  %131 = vdwg.mxu0
  %v133 = vsel %vm39, %v17, 0
  %v136 = vsel %vm39, %v25, 0
  %138 = vmatprep.subr.bf16.mxu0 0
  %139 = vmatpush1.bf16.xpose.msra.mxu0 %v136
  %140 = vmatprep.subr.bf16.mxu0 0
  %141 = vmatpush1.bf16.xpose.msra.mxu0 0
  %142 = vmatprep.subr.bf16.mxu0 0
  %143 = vmatpush1.bf16.xpose.msra.mxu0 0
  %144 = vmatprep.subr.bf16.mxu0 0
  %145 = vmatpush1.bf16.xpose.msra.mxu0 0
  %146 = vmatprep.subr.bf16.mxu0 0
  %147 = vmatpush1.bf16.xpose.msra.mxu0 0
  %148 = vmatprep.subr.bf16.mxu0 0
  %149 = vmatpush1.bf16.xpose.msra.mxu0 0
  %150 = vmatprep.subr.bf16.mxu0 0
  %151 = vmatpush1.bf16.xpose.msra.mxu0 0
  %152 = vmatprep.subr.bf16.mxu0 0
  %153 = vmatpush1.bf16.xpose.msra.mxu0 0
  %154 = vmatprep.subr.bf16.mxu0 0
  %155 = vmatpush1.bf16.xpose.msra.mxu0 0
  %156 = vmatprep.subr.bf16.mxu0 0
  %157 = vmatpush1.bf16.xpose.msra.mxu0 0
  %158 = vmatprep.subr.bf16.mxu0 0
  %159 = vmatpush1.bf16.xpose.msra.mxu0 0
  %160 = vmatprep.subr.bf16.mxu0 0
  %161 = vmatpush1.bf16.xpose.msra.mxu0 0
  %162 = vmatprep.subr.bf16.mxu0 0
  %163 = vmatpush1.bf16.xpose.msra.mxu0 0
  %164 = vmatprep.subr.bf16.mxu0 0
  %165 = vmatpush1.bf16.xpose.msra.mxu0 0
  %166 = vmatprep.subr.bf16.mxu0 0
  %167 = vmatpush1.bf16.xpose.msra.mxu0 0
  %168 = vmatprep.subr.bf16.mxu0 0
  %169 = vmatpush1.bf16.xpose.msra.mxu0 0
  %170 = vmatprep.mubr.bf16.mxu0 0
  %171 = vmatmul.mubr.bf16.gmra.mrb[0].mxu0 %v133
  %v172 = vpop.f32.mrb[0].mxu0
  %v173 = vadd.f32 0.0, %v172
  %v174 = vpop.f32.mrb[0].mxu0
  %v175 = vpop.f32.mrb[0].mxu0
  %v176 = vpop.f32.mrb[0].mxu0
  %177 = vdwg.mxu0
  %v179 = vsel %vm39, %v18, 0
  %v182 = vsel %vm39, %v26, 0
  %184 = vmatprep.subr.bf16.mxu0 0
  %185 = vmatpush1.bf16.xpose.msra.mxu0 %v182
  %186 = vmatprep.subr.bf16.mxu0 0
  %187 = vmatpush1.bf16.xpose.msra.mxu0 0
  %188 = vmatprep.subr.bf16.mxu0 0
  %189 = vmatpush1.bf16.xpose.msra.mxu0 0
  %190 = vmatprep.subr.bf16.mxu0 0
  %191 = vmatpush1.bf16.xpose.msra.mxu0 0
  %192 = vmatprep.subr.bf16.mxu0 0
  %193 = vmatpush1.bf16.xpose.msra.mxu0 0
  %194 = vmatprep.subr.bf16.mxu0 0
  %195 = vmatpush1.bf16.xpose.msra.mxu0 0
  %196 = vmatprep.subr.bf16.mxu0 0
  %197 = vmatpush1.bf16.xpose.msra.mxu0 0
  %198 = vmatprep.subr.bf16.mxu0 0
  %199 = vmatpush1.bf16.xpose.msra.mxu0 0
  %200 = vmatprep.subr.bf16.mxu0 0
  %201 = vmatpush1.bf16.xpose.msra.mxu0 0
  %202 = vmatprep.subr.bf16.mxu0 0
  %203 = vmatpush1.bf16.xpose.msra.mxu0 0
  %204 = vmatprep.subr.bf16.mxu0 0
  %205 = vmatpush1.bf16.xpose.msra.mxu0 0
  %206 = vmatprep.subr.bf16.mxu0 0
  %207 = vmatpush1.bf16.xpose.msra.mxu0 0
  %208 = vmatprep.subr.bf16.mxu0 0
  %209 = vmatpush1.bf16.xpose.msra.mxu0 0
  %210 = vmatprep.subr.bf16.mxu0 0
  %211 = vmatpush1.bf16.xpose.msra.mxu0 0
  %212 = vmatprep.subr.bf16.mxu0 0
  %213 = vmatpush1.bf16.xpose.msra.mxu0 0
  %214 = vmatprep.subr.bf16.mxu0 0
  %215 = vmatpush1.bf16.xpose.msra.mxu0 0
  %216 = vmatprep.mubr.bf16.mxu0 0
  %217 = vmatmul.mubr.bf16.gmra.mrb[0].mxu0 %v179
  %v218 = vpop.f32.mrb[0].mxu0
  %v219 = vadd.f32 0.0, %v218
  %v220 = vpop.f32.mrb[0].mxu0
  %v221 = vpop.f32.mrb[0].mxu0
  %v222 = vpop.f32.mrb[0].mxu0
  %223 = vdwg.mxu0
  %v225 = vsel %vm39, %v19, 0
  %v228 = vsel %vm39, %v27, 0
  %230 = vmatprep.subr.bf16.mxu0 0
  %231 = vmatpush1.bf16.xpose.msra.mxu0 %v228
  %232 = vmatprep.subr.bf16.mxu0 0
  %233 = vmatpush1.bf16.xpose.msra.mxu0 0
  %234 = vmatprep.subr.bf16.mxu0 0
  %235 = vmatpush1.bf16.xpose.msra.mxu0 0
  %236 = vmatprep.subr.bf16.mxu0 0
  %237 = vmatpush1.bf16.xpose.msra.mxu0 0
  %238 = vmatprep.subr.bf16.mxu0 0
  %239 = vmatpush1.bf16.xpose.msra.mxu0 0
  %240 = vmatprep.subr.bf16.mxu0 0
  %241 = vmatpush1.bf16.xpose.msra.mxu0 0
  %242 = vmatprep.subr.bf16.mxu0 0
  %243 = vmatpush1.bf16.xpose.msra.mxu0 0
  %244 = vmatprep.subr.bf16.mxu0 0
  %245 = vmatpush1.bf16.xpose.msra.mxu0 0
  %246 = vmatprep.subr.bf16.mxu0 0
  %247 = vmatpush1.bf16.xpose.msra.mxu0 0
  %248 = vmatprep.subr.bf16.mxu0 0
  %249 = vmatpush1.bf16.xpose.msra.mxu0 0
  %250 = vmatprep.subr.bf16.mxu0 0
  %251 = vmatpush1.bf16.xpose.msra.mxu0 0
  %252 = vmatprep.subr.bf16.mxu0 0
  %253 = vmatpush1.bf16.xpose.msra.mxu0 0
  %254 = vmatprep.subr.bf16.mxu0 0
  %255 = vmatpush1.bf16.xpose.msra.mxu0 0
  %256 = vmatprep.subr.bf16.mxu0 0
  %257 = vmatpush1.bf16.xpose.msra.mxu0 0
  %258 = vmatprep.subr.bf16.mxu0 0
  %259 = vmatpush1.bf16.xpose.msra.mxu0 0
  %260 = vmatprep.subr.bf16.mxu0 0
  %261 = vmatpush1.bf16.xpose.msra.mxu0 0
  %262 = vmatprep.mubr.bf16.mxu0 0
  %263 = vmatmul.mubr.bf16.gmra.mrb[0].mxu0 %v225
  %v264 = vpop.f32.mrb[0].mxu0
  %v265 = vadd.f32 0.0, %v264
  %v266 = vpop.f32.mrb[0].mxu0
  %v267 = vpop.f32.mrb[0].mxu0
  %v268 = vpop.f32.mrb[0].mxu0
  %269 = vdwg.mxu0
  %v271 = vsel %vm39, %v20, 0
  %v274 = vsel %vm39, %v28, 0
  %276 = vmatprep.subr.bf16.mxu0 0
  %277 = vmatpush1.bf16.xpose.msra.mxu0 %v274
  %278 = vmatprep.subr.bf16.mxu0 0
  %279 = vmatpush1.bf16.xpose.msra.mxu0 0
  %280 = vmatprep.subr.bf16.mxu0 0
  %281 = vmatpush1.bf16.xpose.msra.mxu0 0
  %282 = vmatprep.subr.bf16.mxu0 0
  %283 = vmatpush1.bf16.xpose.msra.mxu0 0
  %284 = vmatprep.subr.bf16.mxu0 0
  %285 = vmatpush1.bf16.xpose.msra.mxu0 0
  %286 = vmatprep.subr.bf16.mxu0 0
  %287 = vmatpush1.bf16.xpose.msra.mxu0 0
  %288 = vmatprep.subr.bf16.mxu0 0
  %289 = vmatpush1.bf16.xpose.msra.mxu0 0
  %290 = vmatprep.subr.bf16.mxu0 0
  %291 = vmatpush1.bf16.xpose.msra.mxu0 0
  %292 = vmatprep.subr.bf16.mxu0 0
  %293 = vmatpush1.bf16.xpose.msra.mxu0 0
  %294 = vmatprep.subr.bf16.mxu0 0
  %295 = vmatpush1.bf16.xpose.msra.mxu0 0
  %296 = vmatprep.subr.bf16.mxu0 0
  %297 = vmatpush1.bf16.xpose.msra.mxu0 0
  %298 = vmatprep.subr.bf16.mxu0 0
  %299 = vmatpush1.bf16.xpose.msra.mxu0 0
  %300 = vmatprep.subr.bf16.mxu0 0
  %301 = vmatpush1.bf16.xpose.msra.mxu0 0
  %302 = vmatprep.subr.bf16.mxu0 0
  %303 = vmatpush1.bf16.xpose.msra.mxu0 0
  %304 = vmatprep.subr.bf16.mxu0 0
  %305 = vmatpush1.bf16.xpose.msra.mxu0 0
  %306 = vmatprep.subr.bf16.mxu0 0
  %307 = vmatpush1.bf16.xpose.msra.mxu0 0
  %308 = vmatprep.mubr.bf16.mxu0 0
  %309 = vmatmul.mubr.bf16.gmra.mrb[0].mxu0 %v271
  %v310 = vpop.f32.mrb[0].mxu0
  %v311 = vadd.f32 0.0, %v310
  %v312 = vpop.f32.mrb[0].mxu0
  %v313 = vpop.f32.mrb[0].mxu0
  %v314 = vpop.f32.mrb[0].mxu0
  %315 = vdwg.mxu0
  %v317 = vsel %vm39, %v21, 0
  %v320 = vsel %vm39, %v29, 0
  %322 = vmatprep.subr.bf16.mxu0 0
  %323 = vmatpush1.bf16.xpose.msra.mxu0 %v320
  %324 = vmatprep.subr.bf16.mxu0 0
  %325 = vmatpush1.bf16.xpose.msra.mxu0 0
  %326 = vmatprep.subr.bf16.mxu0 0
  %327 = vmatpush1.bf16.xpose.msra.mxu0 0
  %328 = vmatprep.subr.bf16.mxu0 0
  %329 = vmatpush1.bf16.xpose.msra.mxu0 0
  %330 = vmatprep.subr.bf16.mxu0 0
  %331 = vmatpush1.bf16.xpose.msra.mxu0 0
  %332 = vmatprep.subr.bf16.mxu0 0
  %333 = vmatpush1.bf16.xpose.msra.mxu0 0
  %334 = vmatprep.subr.bf16.mxu0 0
  %335 = vmatpush1.bf16.xpose.msra.mxu0 0
  %336 = vmatprep.subr.bf16.mxu0 0
  %337 = vmatpush1.bf16.xpose.msra.mxu0 0
  %338 = vmatprep.subr.bf16.mxu0 0
  %339 = vmatpush1.bf16.xpose.msra.mxu0 0
  %340 = vmatprep.subr.bf16.mxu0 0
  %341 = vmatpush1.bf16.xpose.msra.mxu0 0
  %342 = vmatprep.subr.bf16.mxu0 0
  %343 = vmatpush1.bf16.xpose.msra.mxu0 0
  %344 = vmatprep.subr.bf16.mxu0 0
  %345 = vmatpush1.bf16.xpose.msra.mxu0 0
  %346 = vmatprep.subr.bf16.mxu0 0
  %347 = vmatpush1.bf16.xpose.msra.mxu0 0
  %348 = vmatprep.subr.bf16.mxu0 0
  %349 = vmatpush1.bf16.xpose.msra.mxu0 0
  %350 = vmatprep.subr.bf16.mxu0 0
  %351 = vmatpush1.bf16.xpose.msra.mxu0 0
  %352 = vmatprep.subr.bf16.mxu0 0
  %353 = vmatpush1.bf16.xpose.msra.mxu0 0
  %354 = vmatprep.mubr.bf16.mxu0 0
  %355 = vmatmul.mubr.bf16.gmra.mrb[0].mxu0 %v317
  %v356 = vpop.f32.mrb[0].mxu0
  %v357 = vadd.f32 0.0, %v356
  %v358 = vpop.f32.mrb[0].mxu0
  %v359 = vpop.f32.mrb[0].mxu0
  %v360 = vpop.f32.mrb[0].mxu0
  %361 = vdwg.mxu0
  %v363 = vsel %vm39, %v22, 0
  %v366 = vsel %vm39, %v30, 0
  %368 = vmatprep.subr.bf16.mxu0 0
  %369 = vmatpush1.bf16.xpose.msra.mxu0 %v366
  %370 = vmatprep.subr.bf16.mxu0 0
  %371 = vmatpush1.bf16.xpose.msra.mxu0 0
  %372 = vmatprep.subr.bf16.mxu0 0
  %373 = vmatpush1.bf16.xpose.msra.mxu0 0
  %374 = vmatprep.subr.bf16.mxu0 0
  %375 = vmatpush1.bf16.xpose.msra.mxu0 0
  %376 = vmatprep.subr.bf16.mxu0 0
  %377 = vmatpush1.bf16.xpose.msra.mxu0 0
  %378 = vmatprep.subr.bf16.mxu0 0
  %379 = vmatpush1.bf16.xpose.msra.mxu0 0
  %380 = vmatprep.subr.bf16.mxu0 0
  %381 = vmatpush1.bf16.xpose.msra.mxu0 0
  %382 = vmatprep.subr.bf16.mxu0 0
  %383 = vmatpush1.bf16.xpose.msra.mxu0 0
  %384 = vmatprep.subr.bf16.mxu0 0
  %385 = vmatpush1.bf16.xpose.msra.mxu0 0
  %386 = vmatprep.subr.bf16.mxu0 0
  %387 = vmatpush1.bf16.xpose.msra.mxu0 0
  %388 = vmatprep.subr.bf16.mxu0 0
  %389 = vmatpush1.bf16.xpose.msra.mxu0 0
  %390 = vmatprep.subr.bf16.mxu0 0
  %391 = vmatpush1.bf16.xpose.msra.mxu0 0
  %392 = vmatprep.subr.bf16.mxu0 0
  %393 = vmatpush1.bf16.xpose.msra.mxu0 0
  %394 = vmatprep.subr.bf16.mxu0 0
  %395 = vmatpush1.bf16.xpose.msra.mxu0 0
  %396 = vmatprep.subr.bf16.mxu0 0
  %397 = vmatpush1.bf16.xpose.msra.mxu0 0
  %398 = vmatprep.subr.bf16.mxu0 0
  %399 = vmatpush1.bf16.xpose.msra.mxu0 0
  %400 = vmatprep.mubr.bf16.mxu0 0
  %401 = vmatmul.mubr.bf16.gmra.mrb[0].mxu0 %v363
  %v402 = vpop.f32.mrb[0].mxu0
  %v403 = vadd.f32 0.0, %v402
  %v404 = vpop.f32.mrb[0].mxu0
  %v405 = vpop.f32.mrb[0].mxu0
  %v406 = vpop.f32.mrb[0].mxu0
  %407 = vdwg.mxu0
  %v408 = vmul.f32 %v81, 0.35355338
  %v409 = vmul.f32 %v127, 0.35355338
  %v410 = vmul.f32 %v173, 0.35355338
  %v411 = vmul.f32 %v219, 0.35355338
  %v412 = vmul.f32 %v265, 0.35355338
  %v413 = vmul.f32 %v311, 0.35355338
  %v414 = vmul.f32 %v357, 0.35355338
  %v415 = vmul.f32 %v403, 0.35355338
  %v416 = vsel %vm39, %v408, -inf
  %417 = vmax.xlane.f32.xlu0 %v416
  %v418 = vpop.xlane.xlu0 %417
  %v419 = vsel %vm39, %v409, -inf
  %420 = vmax.xlane.f32.xlu0 %v419
  %v421 = vpop.xlane.xlu0 %420
  %v422 = vsel %vm39, %v410, -inf
  %423 = vmax.xlane.f32.xlu0 %v422
  %v424 = vpop.xlane.xlu0 %423
  %v425 = vsel %vm39, %v411, -inf
  %426 = vmax.xlane.f32.xlu0 %v425
  %v427 = vpop.xlane.xlu0 %426
  %v428 = vsel %vm39, %v412, -inf
  %429 = vmax.xlane.f32.xlu0 %v428
  %v430 = vpop.xlane.xlu0 %429
  %v431 = vsel %vm39, %v413, -inf
  %432 = vmax.xlane.f32.xlu0 %v431
  %v433 = vpop.xlane.xlu0 %432
  %v434 = vsel %vm39, %v414, -inf
  %435 = vmax.xlane.f32.xlu0 %v434
  %v436 = vpop.xlane.xlu0 %435
  %v437 = vsel %vm39, %v415, -inf
  %438 = vmax.xlane.f32.xlu0 %v437
  %v439 = vpop.xlane.xlu0 %438
  %v440 = vsub.f32 %v408, %v418
  %v441 = vsub.f32 %v409, %v421
  %v442 = vsub.f32 %v410, %v424
  %v443 = vsub.f32 %v411, %v427
  %v444 = vsub.f32 %v412, %v430
  %v445 = vsub.f32 %v413, %v433
  %v446 = vsub.f32 %v414, %v436
  %v447 = vsub.f32 %v415, %v439
  %v448 = vmul.f32 %v440, 1.442695
  %v449 = vpow.pop %v448
  %v450 = vmul.f32 %v441, 1.442695
  %v451 = vpow.pop %v450
  %v452 = vmul.f32 %v442, 1.442695
  %v453 = vpow.pop %v452
  %v454 = vmul.f32 %v443, 1.442695
  %v455 = vpow.pop %v454
  %v456 = vmul.f32 %v444, 1.442695
  %v457 = vpow.pop %v456
  %v458 = vmul.f32 %v445, 1.442695
  %v459 = vpow.pop %v458
  %v460 = vmul.f32 %v446, 1.442695
  %v461 = vpow.pop %v460
  %v462 = vmul.f32 %v447, 1.442695
  %v463 = vpow.pop %v462
  %v464 = vsel %vm39, %v449, 0.0
  %465 = vadd.xlane.f32.xlu0 %v464
  %v466 = vpop.xlane.xlu0 %465
  %v467 = vsel %vm39, %v451, 0.0
  %468 = vadd.xlane.f32.xlu0 %v467
  %v469 = vpop.xlane.xlu0 %468
  %v470 = vsel %vm39, %v453, 0.0
  %471 = vadd.xlane.f32.xlu0 %v470
  %v472 = vpop.xlane.xlu0 %471
  %v473 = vsel %vm39, %v455, 0.0
  %474 = vadd.xlane.f32.xlu0 %v473
  %v475 = vpop.xlane.xlu0 %474
  %v476 = vsel %vm39, %v457, 0.0
  %477 = vadd.xlane.f32.xlu0 %v476
  %v478 = vpop.xlane.xlu0 %477
  %v479 = vsel %vm39, %v459, 0.0
  %480 = vadd.xlane.f32.xlu0 %v479
  %v481 = vpop.xlane.xlu0 %480
  %v482 = vsel %vm39, %v461, 0.0
  %483 = vadd.xlane.f32.xlu0 %v482
  %v484 = vpop.xlane.xlu0 %483
  %v485 = vsel %vm39, %v463, 0.0
  %486 = vadd.xlane.f32.xlu0 %v485
  %v487 = vpop.xlane.xlu0 %486
  %v488 = vrcp.pop %v466
  %v489 = vrcp.pop %v469
  %v490 = vrcp.pop %v472
  %v491 = vrcp.pop %v475
  %v492 = vrcp.pop %v478
  %v493 = vrcp.pop %v481
  %v494 = vrcp.pop %v484
  %v495 = vrcp.pop %v487
  %v496 = vmul.f32 %v449, %v488
  %v497 = vmul.f32 %v451, %v489
  %v498 = vmul.f32 %v453, %v490
  %v499 = vmul.f32 %v455, %v491
  %v500 = vmul.f32 %v457, %v492
  %v501 = vmul.f32 %v459, %v493
  %v502 = vmul.f32 %v461, %v494
  %v503 = vmul.f32 %v463, %v495
  %v504 = vpack.c.bf16 %v496, %v496
  %v505 = vpack.c.bf16 %v497, %v497
  %v506 = vpack.c.bf16 %v498, %v498
  %v507 = vpack.c.bf16 %v499, %v499
  %v508 = vpack.c.bf16 %v500, %v500
  %v509 = vpack.c.bf16 %v501, %v501
  %v510 = vpack.c.bf16 %v502, %v502
  %v511 = vpack.c.bf16 %v503, %v503
  %v513 = vsel %vm39, %v504, 0
  %vm515 = vcmask 1043456
  %v517 = vsel %vm515, %v31, 0
  %519 = vmatprep.subr.bf16.mxu0 0
  %520 = vmatpush1.bf16.msra.mxu0 %v517
  %521 = vmatprep.subr.bf16.mxu0 0
  %522 = vmatpush1.bf16.msra.mxu0 0
  %523 = vmatprep.subr.bf16.mxu0 0
  %524 = vmatpush1.bf16.msra.mxu0 0
  %525 = vmatprep.subr.bf16.mxu0 0
  %526 = vmatpush1.bf16.msra.mxu0 0
  %527 = vmatprep.subr.bf16.mxu0 0
  %528 = vmatpush1.bf16.msra.mxu0 0
  %529 = vmatprep.subr.bf16.mxu0 0
  %530 = vmatpush1.bf16.msra.mxu0 0
  %531 = vmatprep.subr.bf16.mxu0 0
  %532 = vmatpush1.bf16.msra.mxu0 0
  %533 = vmatprep.subr.bf16.mxu0 0
  %534 = vmatpush1.bf16.msra.mxu0 0
  %535 = vmatprep.subr.bf16.mxu0 0
  %536 = vmatpush1.bf16.msra.mxu0 0
  %537 = vmatprep.subr.bf16.mxu0 0
  %538 = vmatpush1.bf16.msra.mxu0 0
  %539 = vmatprep.subr.bf16.mxu0 0
  %540 = vmatpush1.bf16.msra.mxu0 0
  %541 = vmatprep.subr.bf16.mxu0 0
  %542 = vmatpush1.bf16.msra.mxu0 0
  %543 = vmatprep.subr.bf16.mxu0 0
  %544 = vmatpush1.bf16.msra.mxu0 0
  %545 = vmatprep.subr.bf16.mxu0 0
  %546 = vmatpush1.bf16.msra.mxu0 0
  %547 = vmatprep.subr.bf16.mxu0 0
  %548 = vmatpush1.bf16.msra.mxu0 0
  %549 = vmatprep.subr.bf16.mxu0 0
  %550 = vmatpush1.bf16.msra.mxu0 0
  %551 = vmatprep.mubr.bf16.mxu0 0
  %552 = vmatmul.mubr.bf16.gmra.mrb[0].mxu0 %v513
  %v553 = vpop.f32.mrb[0].mxu0
  %v554 = vadd.f32 0.0, %v553
  %v555 = vpop.f32.mrb[0].mxu0
  %v556 = vpop.f32.mrb[0].mxu0
  %v557 = vpop.f32.mrb[0].mxu0
  %558 = vdwg.mxu0
  %v560 = vsel %vm39, %v505, 0
  %v563 = vsel %vm515, %v32, 0
  %565 = vmatprep.subr.bf16.mxu0 0
  %566 = vmatpush1.bf16.msra.mxu0 %v563
  %567 = vmatprep.subr.bf16.mxu0 0
  %568 = vmatpush1.bf16.msra.mxu0 0
  %569 = vmatprep.subr.bf16.mxu0 0
  %570 = vmatpush1.bf16.msra.mxu0 0
  %571 = vmatprep.subr.bf16.mxu0 0
  %572 = vmatpush1.bf16.msra.mxu0 0
  %573 = vmatprep.subr.bf16.mxu0 0
  %574 = vmatpush1.bf16.msra.mxu0 0
  %575 = vmatprep.subr.bf16.mxu0 0
  %576 = vmatpush1.bf16.msra.mxu0 0
  %577 = vmatprep.subr.bf16.mxu0 0
  %578 = vmatpush1.bf16.msra.mxu0 0
  %579 = vmatprep.subr.bf16.mxu0 0
  %580 = vmatpush1.bf16.msra.mxu0 0
  %581 = vmatprep.subr.bf16.mxu0 0
  %582 = vmatpush1.bf16.msra.mxu0 0
  %583 = vmatprep.subr.bf16.mxu0 0
  %584 = vmatpush1.bf16.msra.mxu0 0
  %585 = vmatprep.subr.bf16.mxu0 0
  %586 = vmatpush1.bf16.msra.mxu0 0
  %587 = vmatprep.subr.bf16.mxu0 0
  %588 = vmatpush1.bf16.msra.mxu0 0
  %589 = vmatprep.subr.bf16.mxu0 0
  %590 = vmatpush1.bf16.msra.mxu0 0
  %591 = vmatprep.subr.bf16.mxu0 0
  %592 = vmatpush1.bf16.msra.mxu0 0
  %593 = vmatprep.subr.bf16.mxu0 0
  %594 = vmatpush1.bf16.msra.mxu0 0
  %595 = vmatprep.subr.bf16.mxu0 0
  %596 = vmatpush1.bf16.msra.mxu0 0
  %597 = vmatprep.mubr.bf16.mxu0 0
  %598 = vmatmul.mubr.bf16.gmra.mrb[0].mxu0 %v560
  %v599 = vpop.f32.mrb[0].mxu0
  %v600 = vadd.f32 0.0, %v599
  %v601 = vpop.f32.mrb[0].mxu0
  %v602 = vpop.f32.mrb[0].mxu0
  %v603 = vpop.f32.mrb[0].mxu0
  %604 = vdwg.mxu0
  %v606 = vsel %vm39, %v506, 0
  %v609 = vsel %vm515, %v33, 0
  %611 = vmatprep.subr.bf16.mxu0 0
  %612 = vmatpush1.bf16.msra.mxu0 %v609
  %613 = vmatprep.subr.bf16.mxu0 0
  %614 = vmatpush1.bf16.msra.mxu0 0
  %615 = vmatprep.subr.bf16.mxu0 0
  %616 = vmatpush1.bf16.msra.mxu0 0
  %617 = vmatprep.subr.bf16.mxu0 0
  %618 = vmatpush1.bf16.msra.mxu0 0
  %619 = vmatprep.subr.bf16.mxu0 0
  %620 = vmatpush1.bf16.msra.mxu0 0
  %621 = vmatprep.subr.bf16.mxu0 0
  %622 = vmatpush1.bf16.msra.mxu0 0
  %623 = vmatprep.subr.bf16.mxu0 0
  %624 = vmatpush1.bf16.msra.mxu0 0
  %625 = vmatprep.subr.bf16.mxu0 0
  %626 = vmatpush1.bf16.msra.mxu0 0
  %627 = vmatprep.subr.bf16.mxu0 0
  %628 = vmatpush1.bf16.msra.mxu0 0
  %629 = vmatprep.subr.bf16.mxu0 0
  %630 = vmatpush1.bf16.msra.mxu0 0
  %631 = vmatprep.subr.bf16.mxu0 0
  %632 = vmatpush1.bf16.msra.mxu0 0
  %633 = vmatprep.subr.bf16.mxu0 0
  %634 = vmatpush1.bf16.msra.mxu0 0
  %635 = vmatprep.subr.bf16.mxu0 0
  %636 = vmatpush1.bf16.msra.mxu0 0
  %637 = vmatprep.subr.bf16.mxu0 0
  %638 = vmatpush1.bf16.msra.mxu0 0
  %639 = vmatprep.subr.bf16.mxu0 0
  %640 = vmatpush1.bf16.msra.mxu0 0
  %641 = vmatprep.subr.bf16.mxu0 0
  %642 = vmatpush1.bf16.msra.mxu0 0
  %643 = vmatprep.mubr.bf16.mxu0 0
  %644 = vmatmul.mubr.bf16.gmra.mrb[0].mxu0 %v606
  %v645 = vpop.f32.mrb[0].mxu0
  %v646 = vadd.f32 0.0, %v645
  %v647 = vpop.f32.mrb[0].mxu0
  %v648 = vpop.f32.mrb[0].mxu0
  %v649 = vpop.f32.mrb[0].mxu0
  %650 = vdwg.mxu0
  %v652 = vsel %vm39, %v507, 0
  %v655 = vsel %vm515, %v34, 0
  %657 = vmatprep.subr.bf16.mxu0 0
  %658 = vmatpush1.bf16.msra.mxu0 %v655
  %659 = vmatprep.subr.bf16.mxu0 0
  %660 = vmatpush1.bf16.msra.mxu0 0
  %661 = vmatprep.subr.bf16.mxu0 0
  %662 = vmatpush1.bf16.msra.mxu0 0
  %663 = vmatprep.subr.bf16.mxu0 0
  %664 = vmatpush1.bf16.msra.mxu0 0
  %665 = vmatprep.subr.bf16.mxu0 0
  %666 = vmatpush1.bf16.msra.mxu0 0
  %667 = vmatprep.subr.bf16.mxu0 0
  %668 = vmatpush1.bf16.msra.mxu0 0
  %669 = vmatprep.subr.bf16.mxu0 0
  %670 = vmatpush1.bf16.msra.mxu0 0
  %671 = vmatprep.subr.bf16.mxu0 0
  %672 = vmatpush1.bf16.msra.mxu0 0
  %673 = vmatprep.subr.bf16.mxu0 0
  %674 = vmatpush1.bf16.msra.mxu0 0
  %675 = vmatprep.subr.bf16.mxu0 0
  %676 = vmatpush1.bf16.msra.mxu0 0
  %677 = vmatprep.subr.bf16.mxu0 0
  %678 = vmatpush1.bf16.msra.mxu0 0
  %679 = vmatprep.subr.bf16.mxu0 0
  %680 = vmatpush1.bf16.msra.mxu0 0
  %681 = vmatprep.subr.bf16.mxu0 0
  %682 = vmatpush1.bf16.msra.mxu0 0
  %683 = vmatprep.subr.bf16.mxu0 0
  %684 = vmatpush1.bf16.msra.mxu0 0
  %685 = vmatprep.subr.bf16.mxu0 0
  %686 = vmatpush1.bf16.msra.mxu0 0
  %687 = vmatprep.subr.bf16.mxu0 0
  %688 = vmatpush1.bf16.msra.mxu0 0
  %689 = vmatprep.mubr.bf16.mxu0 0
  %690 = vmatmul.mubr.bf16.gmra.mrb[0].mxu0 %v652
  %v691 = vpop.f32.mrb[0].mxu0
  %v692 = vadd.f32 0.0, %v691
  %v693 = vpop.f32.mrb[0].mxu0
  %v694 = vpop.f32.mrb[0].mxu0
  %v695 = vpop.f32.mrb[0].mxu0
  %696 = vdwg.mxu0
  %v698 = vsel %vm39, %v508, 0
  %v701 = vsel %vm515, %v35, 0
  %703 = vmatprep.subr.bf16.mxu0 0
  %704 = vmatpush1.bf16.msra.mxu0 %v701
  %705 = vmatprep.subr.bf16.mxu0 0
  %706 = vmatpush1.bf16.msra.mxu0 0
  %707 = vmatprep.subr.bf16.mxu0 0
  %708 = vmatpush1.bf16.msra.mxu0 0
  %709 = vmatprep.subr.bf16.mxu0 0
  %710 = vmatpush1.bf16.msra.mxu0 0
  %711 = vmatprep.subr.bf16.mxu0 0
  %712 = vmatpush1.bf16.msra.mxu0 0
  %713 = vmatprep.subr.bf16.mxu0 0
  %714 = vmatpush1.bf16.msra.mxu0 0
  %715 = vmatprep.subr.bf16.mxu0 0
  %716 = vmatpush1.bf16.msra.mxu0 0
  %717 = vmatprep.subr.bf16.mxu0 0
  %718 = vmatpush1.bf16.msra.mxu0 0
  %719 = vmatprep.subr.bf16.mxu0 0
  %720 = vmatpush1.bf16.msra.mxu0 0
  %721 = vmatprep.subr.bf16.mxu0 0
  %722 = vmatpush1.bf16.msra.mxu0 0
  %723 = vmatprep.subr.bf16.mxu0 0
  %724 = vmatpush1.bf16.msra.mxu0 0
  %725 = vmatprep.subr.bf16.mxu0 0
  %726 = vmatpush1.bf16.msra.mxu0 0
  %727 = vmatprep.subr.bf16.mxu0 0
  %728 = vmatpush1.bf16.msra.mxu0 0
  %729 = vmatprep.subr.bf16.mxu0 0
  %730 = vmatpush1.bf16.msra.mxu0 0
  %731 = vmatprep.subr.bf16.mxu0 0
  %732 = vmatpush1.bf16.msra.mxu0 0
  %733 = vmatprep.subr.bf16.mxu0 0
  %734 = vmatpush1.bf16.msra.mxu0 0
  %735 = vmatprep.mubr.bf16.mxu0 0
  %736 = vmatmul.mubr.bf16.gmra.mrb[0].mxu0 %v698
  %v737 = vpop.f32.mrb[0].mxu0
  %v738 = vadd.f32 0.0, %v737
  %v739 = vpop.f32.mrb[0].mxu0
  %v740 = vpop.f32.mrb[0].mxu0
  %v741 = vpop.f32.mrb[0].mxu0
  %742 = vdwg.mxu0
  %v744 = vsel %vm39, %v509, 0
  %v747 = vsel %vm515, %v36, 0
  %749 = vmatprep.subr.bf16.mxu0 0
  %750 = vmatpush1.bf16.msra.mxu0 %v747
  %751 = vmatprep.subr.bf16.mxu0 0
  %752 = vmatpush1.bf16.msra.mxu0 0
  %753 = vmatprep.subr.bf16.mxu0 0
  %754 = vmatpush1.bf16.msra.mxu0 0
  %755 = vmatprep.subr.bf16.mxu0 0
  %756 = vmatpush1.bf16.msra.mxu0 0
  %757 = vmatprep.subr.bf16.mxu0 0
  %758 = vmatpush1.bf16.msra.mxu0 0
  %759 = vmatprep.subr.bf16.mxu0 0
  %760 = vmatpush1.bf16.msra.mxu0 0
  %761 = vmatprep.subr.bf16.mxu0 0
  %762 = vmatpush1.bf16.msra.mxu0 0
  %763 = vmatprep.subr.bf16.mxu0 0
  %764 = vmatpush1.bf16.msra.mxu0 0
  %765 = vmatprep.subr.bf16.mxu0 0
  %766 = vmatpush1.bf16.msra.mxu0 0
  %767 = vmatprep.subr.bf16.mxu0 0
  %768 = vmatpush1.bf16.msra.mxu0 0
  %769 = vmatprep.subr.bf16.mxu0 0
  %770 = vmatpush1.bf16.msra.mxu0 0
  %771 = vmatprep.subr.bf16.mxu0 0
  %772 = vmatpush1.bf16.msra.mxu0 0
  %773 = vmatprep.subr.bf16.mxu0 0
  %774 = vmatpush1.bf16.msra.mxu0 0
  %775 = vmatprep.subr.bf16.mxu0 0
  %776 = vmatpush1.bf16.msra.mxu0 0
  %777 = vmatprep.subr.bf16.mxu0 0
  %778 = vmatpush1.bf16.msra.mxu0 0
  %779 = vmatprep.subr.bf16.mxu0 0
  %780 = vmatpush1.bf16.msra.mxu0 0
  %781 = vmatprep.mubr.bf16.mxu0 0
  %782 = vmatmul.mubr.bf16.gmra.mrb[0].mxu0 %v744
  %v783 = vpop.f32.mrb[0].mxu0
  %v784 = vadd.f32 0.0, %v783
  %v785 = vpop.f32.mrb[0].mxu0
  %v786 = vpop.f32.mrb[0].mxu0
  %v787 = vpop.f32.mrb[0].mxu0
  %788 = vdwg.mxu0
  %v790 = vsel %vm39, %v510, 0
  %v793 = vsel %vm515, %v37, 0
  %795 = vmatprep.subr.bf16.mxu0 0
  %796 = vmatpush1.bf16.msra.mxu0 %v793
  %797 = vmatprep.subr.bf16.mxu0 0
  %798 = vmatpush1.bf16.msra.mxu0 0
  %799 = vmatprep.subr.bf16.mxu0 0
  %800 = vmatpush1.bf16.msra.mxu0 0
  %801 = vmatprep.subr.bf16.mxu0 0
  %802 = vmatpush1.bf16.msra.mxu0 0
  %803 = vmatprep.subr.bf16.mxu0 0
  %804 = vmatpush1.bf16.msra.mxu0 0
  %805 = vmatprep.subr.bf16.mxu0 0
  %806 = vmatpush1.bf16.msra.mxu0 0
  %807 = vmatprep.subr.bf16.mxu0 0
  %808 = vmatpush1.bf16.msra.mxu0 0
  %809 = vmatprep.subr.bf16.mxu0 0
  %810 = vmatpush1.bf16.msra.mxu0 0
  %811 = vmatprep.subr.bf16.mxu0 0
  %812 = vmatpush1.bf16.msra.mxu0 0
  %813 = vmatprep.subr.bf16.mxu0 0
  %814 = vmatpush1.bf16.msra.mxu0 0
  %815 = vmatprep.subr.bf16.mxu0 0
  %816 = vmatpush1.bf16.msra.mxu0 0
  %817 = vmatprep.subr.bf16.mxu0 0
  %818 = vmatpush1.bf16.msra.mxu0 0
  %819 = vmatprep.subr.bf16.mxu0 0
  %820 = vmatpush1.bf16.msra.mxu0 0
  %821 = vmatprep.subr.bf16.mxu0 0
  %822 = vmatpush1.bf16.msra.mxu0 0
  %823 = vmatprep.subr.bf16.mxu0 0
  %824 = vmatpush1.bf16.msra.mxu0 0
  %825 = vmatprep.subr.bf16.mxu0 0
  %826 = vmatpush1.bf16.msra.mxu0 0
  %827 = vmatprep.mubr.bf16.mxu0 0
  %828 = vmatmul.mubr.bf16.gmra.mrb[0].mxu0 %v790
  %v829 = vpop.f32.mrb[0].mxu0
  %v830 = vadd.f32 0.0, %v829
  %v831 = vpop.f32.mrb[0].mxu0
  %v832 = vpop.f32.mrb[0].mxu0
  %v833 = vpop.f32.mrb[0].mxu0
  %834 = vdwg.mxu0
  %v836 = vsel %vm39, %v511, 0
  %v839 = vsel %vm515, %v38, 0
  %841 = vmatprep.subr.bf16.mxu0 0
  %842 = vmatpush1.bf16.msra.mxu0 %v839
  %843 = vmatprep.subr.bf16.mxu0 0
  %844 = vmatpush1.bf16.msra.mxu0 0
  %845 = vmatprep.subr.bf16.mxu0 0
  %846 = vmatpush1.bf16.msra.mxu0 0
  %847 = vmatprep.subr.bf16.mxu0 0
  %848 = vmatpush1.bf16.msra.mxu0 0
  %849 = vmatprep.subr.bf16.mxu0 0
  %850 = vmatpush1.bf16.msra.mxu0 0
  %851 = vmatprep.subr.bf16.mxu0 0
  %852 = vmatpush1.bf16.msra.mxu0 0
  %853 = vmatprep.subr.bf16.mxu0 0
  %854 = vmatpush1.bf16.msra.mxu0 0
  %855 = vmatprep.subr.bf16.mxu0 0
  %856 = vmatpush1.bf16.msra.mxu0 0
  %857 = vmatprep.subr.bf16.mxu0 0
  %858 = vmatpush1.bf16.msra.mxu0 0
  %859 = vmatprep.subr.bf16.mxu0 0
  %860 = vmatpush1.bf16.msra.mxu0 0
  %861 = vmatprep.subr.bf16.mxu0 0
  %862 = vmatpush1.bf16.msra.mxu0 0
  %863 = vmatprep.subr.bf16.mxu0 0
  %864 = vmatpush1.bf16.msra.mxu0 0
  %865 = vmatprep.subr.bf16.mxu0 0
  %866 = vmatpush1.bf16.msra.mxu0 0
  %867 = vmatprep.subr.bf16.mxu0 0
  %868 = vmatpush1.bf16.msra.mxu0 0
  %869 = vmatprep.subr.bf16.mxu0 0
  %870 = vmatpush1.bf16.msra.mxu0 0
  %871 = vmatprep.subr.bf16.mxu0 0
  %872 = vmatpush1.bf16.msra.mxu0 0
  %873 = vmatprep.mubr.bf16.mxu0 0
  %874 = vmatmul.mubr.bf16.gmra.mrb[0].mxu0 %v836
  %v875 = vpop.f32.mrb[0].mxu0
  %v876 = vadd.f32 0.0, %v875
  %v877 = vpop.f32.mrb[0].mxu0
  %v878 = vpop.f32.mrb[0].mxu0
  %v879 = vpop.f32.mrb[0].mxu0
  %880 = vdwg.mxu0
  %v881 = vpack.c.bf16 %v554, %v554
  %v882 = vpack.c.bf16 %v600, %v600
  %v883 = vpack.c.bf16 %v646, %v646
  %v884 = vpack.c.bf16 %v692, %v692
  %v885 = vpack.c.bf16 %v738, %v738
  %v886 = vpack.c.bf16 %v784, %v784
  %v887 = vpack.c.bf16 %v830, %v830
  %v888 = vpack.c.bf16 %v876, %v876
  %vm889 = vcmask 60416
  %890 = vst.msk [vmem:[%s3] sm:$0xf] %vm889, %v881
  %891 = vst.msk [vmem:[%s3 + $0x4] sm:$0xf] %vm889, %v882
  %892 = vst.msk [vmem:[%s3 + $0x8] sm:$0xf] %vm889, %v883
  %893 = vst.msk [vmem:[%s3 + $0xc] sm:$0xf] %vm889, %v884
  %894 = vst.msk [vmem:[%s3 + $0x10] sm:$0xf] %vm889, %v885
  %895 = vst.msk [vmem:[%s3 + $0x14] sm:$0xf] %vm889, %v886
  %896 = vst.msk [vmem:[%s3 + $0x18] sm:$0xf] %vm889, %v887
  %897 = vst.msk [vmem:[%s3 + $0x1c] sm:$0xf] %vm889, %v888
  // Predicated region
  $region14: #{transformer_forward.24} parent=0 // pred_check
    _
  $region15: #{transformer_forward.24} parent=0 // pred_check_branch
    %899 = sbr.rel (0) target = $region17
  $region16: #{transformer_forward.24} parent=0 // pred_region
    _
  $region17: #{transformer_forward.24} parent=0 // pred_fallthru
    _
  // Predicated region
  $region18: #{transformer_forward.24} parent=0 // pred_check
    _
  $region19: #{transformer_forward.24} parent=0 // pred_check_branch
    %901 = sbr.rel (0) target = $region21
  $region20: #{transformer_forward.24} parent=0 // pred_region
    _
  $region21: #{transformer_forward.24} parent=0 // pred_fallthru
    _

// kernel: transformer_forward.25
$region0: #{transformer_forward.25}
  #allocation0 [shape = 'u32[]', space=smem, size = 0x4, offset = 0x4, fixed_abs, tag = 'smem constant byte address 0x4 - core index']
  #allocation1 [shape = 'u32[144,128]{1,0:T(1,128)}', space=vmem, size = 0x12000, scoped, tag = 'internal scratch']
  %s0 = inlined_call_operand.vmem [shape: bf16[16,32], index: 0, kind: input, shape index: {}]
  %s1 = inlined_call_operand.vmem [shape: f32[16,32], index: 1, kind: input, shape index: {}]
  %s2 = inlined_call_operand.vmem [shape: bf16[32,32], index: 2, kind: input, shape index: {}]
  %s3 = inlined_call_operand.vmem [shape: f32[1,32], index: 3, kind: input, shape index: {}]
  %s4 = inlined_call_operand.vmem [shape: f32[1,32], index: 4, kind: input, shape index: {}]
  %s5 = inlined_call_operand.vmem [shape: f32[1,32], index: 5, kind: input, shape index: {}]
  %s6 = inlined_call_operand.vmem [shape: f32[16,32], index: 6, kind: output, shape index: {}]
  %s7 = sld [smem:[#allocation0]]
  $region34: #{transformer_forward.25} parent=0
    _
  %s9 = ssub.s32 1, %s7
  %s10 = scalar_select 0, %s9, %s7
  // Predicated region
  $region2: #{transformer_forward.25} parent=0 // pred_check
    _
  $region3: #{transformer_forward.25} parent=0 // pred_check_branch
    %12 = sbr.rel (0) target = $region5
  $region4: #{transformer_forward.25} parent=0 // pred_region
    _
  $region5: #{transformer_forward.25} parent=0 // pred_fallthru
    _
  // Predicated region
  $region6: #{transformer_forward.25} parent=0 // pred_check
    _
  $region7: #{transformer_forward.25} parent=0 // pred_check_branch
    %14 = sbr.rel (0) target = $region9
  $region8: #{transformer_forward.25} parent=0 // pred_region
    _
  $region9: #{transformer_forward.25} parent=0 // pred_fallthru
    _
  // Predicated region
  $region10: #{transformer_forward.25} parent=0 // pred_check
    _
  $region11: #{transformer_forward.25} parent=0 // pred_check_branch
    %16 = sbr.rel (0) target = $region13
  $region12: #{transformer_forward.25} parent=0 // pred_region
    _
  $region13: #{transformer_forward.25} parent=0 // pred_fallthru
    _
  // Predicated region
  $region14: #{transformer_forward.25} parent=0 // pred_check
    _
  $region15: #{transformer_forward.25} parent=0 // pred_check_branch
    %18 = sbr.rel (0) target = $region17
  $region16: #{transformer_forward.25} parent=0 // pred_region
    _
  $region17: #{transformer_forward.25} parent=0 // pred_fallthru
    _
  // Predicated region
  $region18: #{transformer_forward.25} parent=0 // pred_check
    _
  $region19: #{transformer_forward.25} parent=0 // pred_check_branch
    %20 = sbr.rel (0) target = $region21
  $region20: #{transformer_forward.25} parent=0 // pred_region
    _
  $region21: #{transformer_forward.25} parent=0 // pred_fallthru
    _
  // Predicated region
  $region22: #{transformer_forward.25} parent=0 // pred_check
    _
  $region23: #{transformer_forward.25} parent=0 // pred_check_branch
    %22 = sbr.rel (0) target = $region25
  $region24: #{transformer_forward.25} parent=0 // pred_region
    _
  $region25: #{transformer_forward.25} parent=0 // pred_fallthru
    _
  %v24 = vld [vmem:[%s0] sm:$0xf]
  %v25 = vld [vmem:[%s0 + $0x4] sm:$0xf]
  %v26 = vld [vmem:[%s2] sm:$0xf]
  %v27 = vld [vmem:[%s2 + $0x4] sm:$0xf]
  %v28 = vld [vmem:[%s2 + $0x8] sm:$0xf]
  %v29 = vld [vmem:[%s2 + $0xc] sm:$0xf]
  %v30 = vld [vmem:[%s3] sm:$0x1]
  %v32 = vlaneseq
  %v33 = vshrl.u32 %v32, 7
  %v34 = vsub.s32 0, %v33
  %v35 = vrot.slane %v30, %v34
  %v39 = vunpack.c.l.b16 %v24
  %v40 = vunpack.c.l.b16 %v25
  %v41 = vpack.c.b16 %v40, %v39
  %v46 = vunpack.c.l.b16 %v26
  %v47 = vunpack.c.l.b16 %v27
  %v48 = vunpack.c.l.b16 %v28
  %v49 = vunpack.c.l.b16 %v29
  %v50 = vpack.c.b16 %v47, %v46
  %v51 = vpack.c.b16 %v49, %v48
  %vm54 = vcmask 261120
  %v56 = vsel %vm54, %v41, 0
  %58 = vmatprep.subr.bf16.mxu0 0
  %59 = vmatpush1.bf16.msra.mxu0 %v50
  %60 = vmatprep.subr.bf16.mxu0 0
  %61 = vmatpush1.bf16.msra.mxu0 %v51
  %62 = vmatprep.subr.bf16.mxu0 0
  %63 = vmatpush1.bf16.msra.mxu0 0
  %64 = vmatprep.subr.bf16.mxu0 0
  %65 = vmatpush1.bf16.msra.mxu0 0
  %66 = vmatprep.subr.bf16.mxu0 0
  %67 = vmatpush1.bf16.msra.mxu0 0
  %68 = vmatprep.subr.bf16.mxu0 0
  %69 = vmatpush1.bf16.msra.mxu0 0
  %70 = vmatprep.subr.bf16.mxu0 0
  %71 = vmatpush1.bf16.msra.mxu0 0
  %72 = vmatprep.subr.bf16.mxu0 0
  %73 = vmatpush1.bf16.msra.mxu0 0
  %74 = vmatprep.subr.bf16.mxu0 0
  %75 = vmatpush1.bf16.msra.mxu0 0
  %76 = vmatprep.subr.bf16.mxu0 0
  %77 = vmatpush1.bf16.msra.mxu0 0
  %78 = vmatprep.subr.bf16.mxu0 0
  %79 = vmatpush1.bf16.msra.mxu0 0
  %80 = vmatprep.subr.bf16.mxu0 0
  %81 = vmatpush1.bf16.msra.mxu0 0
  %82 = vmatprep.subr.bf16.mxu0 0
  %83 = vmatpush1.bf16.msra.mxu0 0
  %84 = vmatprep.subr.bf16.mxu0 0
  %85 = vmatpush1.bf16.msra.mxu0 0
  %86 = vmatprep.subr.bf16.mxu0 0
  %87 = vmatpush1.bf16.msra.mxu0 0
  %88 = vmatprep.subr.bf16.mxu0 0
  %89 = vmatpush1.bf16.msra.mxu0 0
  %90 = vmatprep.mubr.bf16.mxu0 0
  %91 = vmatmul.mubr.bf16.gmra.mrb[0].mxu0 %v56
  %v92 = vpop.f32.mrb[0].mxu0
  %v93 = vadd.f32 %v35, %v92
  %v94 = vpop.f32.mrb[0].mxu0
  %v95 = vpop.f32.mrb[0].mxu0
  %v96 = vadd.f32 %v35, %v95
  %v97 = vpop.f32.mrb[0].mxu0
  %98 = vdwg.mxu0
  %v99 = vld [vmem:[%s1] sm:$0xff]
  %v100 = vld [vmem:[%s1 + $0x8] sm:$0xff]
  %v101 = vadd.f32 %v93, %v99
  %v102 = vadd.f32 %v96, %v100
  %v103 = vsel %vm54, %v101, 0.0
  %104 = vadd.xlane.f32.xlu0 %v103
  %v105 = vpop.xlane.xlu0 %104
  %v106 = vsel %vm54, %v102, 0.0
  %107 = vadd.xlane.f32.xlu0 %v106
  %v108 = vpop.xlane.xlu0 %107
  %v109 = vrcp.pop 32.0
  %v110 = vmul.f32 %v105, %v109
  %v111 = vmul.f32 %v108, %v109
  %v112 = vsub.f32 %v101, %v110
  %v113 = vsub.f32 %v102, %v111
  %v114 = vmul.f32 %v112, %v112
  %v115 = vmul.f32 %v113, %v113
  %v116 = vsel %vm54, %v114, 0.0
  %117 = vadd.xlane.f32.xlu0 %v116
  %v118 = vpop.xlane.xlu0 %117
  %v119 = vsel %vm54, %v115, 0.0
  %120 = vadd.xlane.f32.xlu0 %v119
  %v121 = vpop.xlane.xlu0 %120
  %v122 = vmul.f32 %v118, %v109
  %v123 = vmul.f32 %v121, %v109
  %v124 = vadd.f32 %v122, 1e-05
  %v125 = vadd.f32 %v123, 1e-05
  %v126 = vrsqrt.pop %v124
  %v127 = vrsqrt.pop %v125
  %v128 = vmul.f32 %v112, %v126
  %v129 = vmul.f32 %v113, %v127
  %v130 = vld [vmem:[%s4] sm:$0x1]
  %v132 = vlaneseq
  %v133 = vshrl.u32 %v132, 7
  %v134 = vsub.s32 0, %v133
  %v135 = vrot.slane %v130, %v134
  %v137 = vmul.f32 %v128, %v135
  %v138 = vmul.f32 %v129, %v135
  %v139 = vld [vmem:[%s5] sm:$0x1]
  %v141 = vlaneseq
  %v142 = vshrl.u32 %v141, 7
  %v143 = vsub.s32 0, %v142
  %v144 = vrot.slane %v139, %v143
  %v146 = vadd.f32 %v137, %v144
  %v147 = vadd.f32 %v138, %v144
  %148 = vst.msk [vmem:[%s6] sm:$0xff] %vm54, %v146
  %149 = vst.msk [vmem:[%s6 + $0x8] sm:$0xff] %vm54, %v147
  // Predicated region
  $region26: #{transformer_forward.25} parent=0 // pred_check
    _
  $region27: #{transformer_forward.25} parent=0 // pred_check_branch
    %151 = sbr.rel (0) target = $region29
  $region28: #{transformer_forward.25} parent=0 // pred_region
    _
  $region29: #{transformer_forward.25} parent=0 // pred_fallthru
    _
  // Predicated region
  $region30: #{transformer_forward.25} parent=0 // pred_check
    _
  $region31: #{transformer_forward.25} parent=0 // pred_check_branch
    %153 = sbr.rel (0) target = $region33
  $region32: #{transformer_forward.25} parent=0 // pred_region
    _
  $region33: #{transformer_forward.25} parent=0 // pred_fallthru
    _

// kernel: transformer_forward.26
$region0: #{transformer_forward.26}
  #allocation0 [shape = 'u32[]', space=smem, size = 0x4, offset = 0x4, fixed_abs, tag = 'smem constant byte address 0x4 - core index']
  #allocation1 [shape = 'u32[144,128]{1,0:T(1,128)}', space=vmem, size = 0x12000, scoped, tag = 'internal scratch']
  %s0 = inlined_call_operand.vmem [shape: f32[16,32], index: 0, kind: input, shape index: {}]
  %s1 = inlined_call_operand.vmem [shape: bf16[32,64], index: 1, kind: input, shape index: {}]
  %s2 = inlined_call_operand.vmem [shape: f32[1,64], index: 2, kind: input, shape index: {}]
  %s3 = inlined_call_operand.vmem [shape: bf16[64,32], index: 3, kind: input, shape index: {}]
  %s4 = inlined_call_operand.vmem [shape: f32[1,32], index: 4, kind: input, shape index: {}]
  %s5 = inlined_call_operand.vmem [shape: f32[1,32], index: 5, kind: input, shape index: {}]
  %s6 = inlined_call_operand.vmem [shape: f32[1,32], index: 6, kind: input, shape index: {}]
  %s7 = inlined_call_operand.vmem [shape: f32[16,32], index: 7, kind: output, shape index: {}]
  %s8 = sld [smem:[#allocation0]]
  $region38: #{transformer_forward.26} parent=0
    _
  %s10 = ssub.s32 1, %s8
  %s11 = scalar_select 0, %s10, %s8
  // Predicated region
  $region2: #{transformer_forward.26} parent=0 // pred_check
    _
  $region3: #{transformer_forward.26} parent=0 // pred_check_branch
    %13 = sbr.rel (0) target = $region5
  $region4: #{transformer_forward.26} parent=0 // pred_region
    _
  $region5: #{transformer_forward.26} parent=0 // pred_fallthru
    _
  // Predicated region
  $region6: #{transformer_forward.26} parent=0 // pred_check
    _
  $region7: #{transformer_forward.26} parent=0 // pred_check_branch
    %15 = sbr.rel (0) target = $region9
  $region8: #{transformer_forward.26} parent=0 // pred_region
    _
  $region9: #{transformer_forward.26} parent=0 // pred_fallthru
    _
  // Predicated region
  $region10: #{transformer_forward.26} parent=0 // pred_check
    _
  $region11: #{transformer_forward.26} parent=0 // pred_check_branch
    %17 = sbr.rel (0) target = $region13
  $region12: #{transformer_forward.26} parent=0 // pred_region
    _
  $region13: #{transformer_forward.26} parent=0 // pred_fallthru
    _
  // Predicated region
  $region14: #{transformer_forward.26} parent=0 // pred_check
    _
  $region15: #{transformer_forward.26} parent=0 // pred_check_branch
    %19 = sbr.rel (0) target = $region17
  $region16: #{transformer_forward.26} parent=0 // pred_region
    _
  $region17: #{transformer_forward.26} parent=0 // pred_fallthru
    _
  // Predicated region
  $region18: #{transformer_forward.26} parent=0 // pred_check
    _
  $region19: #{transformer_forward.26} parent=0 // pred_check_branch
    %21 = sbr.rel (0) target = $region21
  $region20: #{transformer_forward.26} parent=0 // pred_region
    _
  $region21: #{transformer_forward.26} parent=0 // pred_fallthru
    _
  // Predicated region
  $region22: #{transformer_forward.26} parent=0 // pred_check
    _
  $region23: #{transformer_forward.26} parent=0 // pred_check_branch
    %23 = sbr.rel (0) target = $region25
  $region24: #{transformer_forward.26} parent=0 // pred_region
    _
  $region25: #{transformer_forward.26} parent=0 // pred_fallthru
    _
  // Predicated region
  $region26: #{transformer_forward.26} parent=0 // pred_check
    _
  $region27: #{transformer_forward.26} parent=0 // pred_check_branch
    %25 = sbr.rel (0) target = $region29
  $region28: #{transformer_forward.26} parent=0 // pred_region
    _
  $region29: #{transformer_forward.26} parent=0 // pred_fallthru
    _
  %v27 = vld [vmem:[%s0] sm:$0xff]
  %v28 = vld [vmem:[%s0 + $0x8] sm:$0xff]
  %v29 = vpack.c.bf16 %v28, %v27
  %v30 = vld [vmem:[%s1] sm:$0xf]
  %v31 = vld [vmem:[%s1 + $0x4] sm:$0xf]
  %v32 = vld [vmem:[%s1 + $0x8] sm:$0xf]
  %v33 = vld [vmem:[%s1 + $0xc] sm:$0xf]
  %v34 = vld [vmem:[%s2] sm:$0x1]
  %v36 = vlaneseq
  %v37 = vshrl.u32 %v36, 7
  %v38 = vsub.s32 0, %v37
  %v39 = vrot.slane %v34, %v38
  %v45 = vunpack.c.l.b16 %v30
  %v46 = vunpack.c.l.b16 %v31
  %v47 = vunpack.c.l.b16 %v32
  %v48 = vunpack.c.l.b16 %v33
  %v49 = vpack.c.b16 %v46, %v45
  %v50 = vpack.c.b16 %v48, %v47
  %vm53 = vcmask 261120
  %v55 = vsel %vm53, %v29, 0
  %57 = vmatprep.subr.bf16.mxu0 0
  %58 = vmatpush1.bf16.msra.mxu0 %v49
  %59 = vmatprep.subr.bf16.mxu0 0
  %60 = vmatpush1.bf16.msra.mxu0 %v50
  %61 = vmatprep.subr.bf16.mxu0 0
  %62 = vmatpush1.bf16.msra.mxu0 0
  %63 = vmatprep.subr.bf16.mxu0 0
  %64 = vmatpush1.bf16.msra.mxu0 0
  %65 = vmatprep.subr.bf16.mxu0 0
  %66 = vmatpush1.bf16.msra.mxu0 0
  %67 = vmatprep.subr.bf16.mxu0 0
  %68 = vmatpush1.bf16.msra.mxu0 0
  %69 = vmatprep.subr.bf16.mxu0 0
  %70 = vmatpush1.bf16.msra.mxu0 0
  %71 = vmatprep.subr.bf16.mxu0 0
  %72 = vmatpush1.bf16.msra.mxu0 0
  %73 = vmatprep.subr.bf16.mxu0 0
  %74 = vmatpush1.bf16.msra.mxu0 0
  %75 = vmatprep.subr.bf16.mxu0 0
  %76 = vmatpush1.bf16.msra.mxu0 0
  %77 = vmatprep.subr.bf16.mxu0 0
  %78 = vmatpush1.bf16.msra.mxu0 0
  %79 = vmatprep.subr.bf16.mxu0 0
  %80 = vmatpush1.bf16.msra.mxu0 0
  %81 = vmatprep.subr.bf16.mxu0 0
  %82 = vmatpush1.bf16.msra.mxu0 0
  %83 = vmatprep.subr.bf16.mxu0 0
  %84 = vmatpush1.bf16.msra.mxu0 0
  %85 = vmatprep.subr.bf16.mxu0 0
  %86 = vmatpush1.bf16.msra.mxu0 0
  %87 = vmatprep.subr.bf16.mxu0 0
  %88 = vmatpush1.bf16.msra.mxu0 0
  %89 = vmatprep.mubr.bf16.mxu0 0
  %90 = vmatmul.mubr.bf16.gmra.mrb[0].mxu0 %v55
  %v91 = vpop.f32.mrb[0].mxu0
  %v92 = vadd.f32 %v39, %v91
  %v93 = vpop.f32.mrb[0].mxu0
  %v94 = vpop.f32.mrb[0].mxu0
  %v95 = vadd.f32 %v39, %v94
  %v96 = vpop.f32.mrb[0].mxu0
  %97 = vdwg.mxu0
  %v98 = vmax.f32 %v92, 0.0
  %v99 = vmax.f32 %v95, 0.0
  %v100 = vpack.c.bf16 %v99, %v98
  %v101 = vld [vmem:[%s3] sm:$0xf]
  %v102 = vld [vmem:[%s3 + $0x4] sm:$0xf]
  %v103 = vld [vmem:[%s3 + $0x8] sm:$0xf]
  %v104 = vld [vmem:[%s3 + $0xc] sm:$0xf]
  %v105 = vld [vmem:[%s3 + $0x10] sm:$0xf]
  %v106 = vld [vmem:[%s3 + $0x14] sm:$0xf]
  %v107 = vld [vmem:[%s3 + $0x18] sm:$0xf]
  %v108 = vld [vmem:[%s3 + $0x1c] sm:$0xf]
  %v109 = vld [vmem:[%s4] sm:$0x1]
  %v111 = vlaneseq
  %v112 = vshrl.u32 %v111, 7
  %v113 = vsub.s32 0, %v112
  %v114 = vrot.slane %v109, %v113
  %v124 = vunpack.c.l.b16 %v101
  %v125 = vunpack.c.l.b16 %v102
  %v126 = vunpack.c.l.b16 %v103
  %v127 = vunpack.c.l.b16 %v104
  %v128 = vunpack.c.l.b16 %v105
  %v129 = vunpack.c.l.b16 %v106
  %v130 = vunpack.c.l.b16 %v107
  %v131 = vunpack.c.l.b16 %v108
  %v132 = vpack.c.b16 %v125, %v124
  %v133 = vpack.c.b16 %v127, %v126
  %v134 = vpack.c.b16 %v129, %v128
  %v135 = vpack.c.b16 %v131, %v130
  %vm140 = vcmask 523264
  %v142 = vsel %vm140, %v100, 0
  %144 = vmatprep.subr.bf16.mxu0 0
  %145 = vmatpush1.bf16.msra.mxu0 %v132
  %146 = vmatprep.subr.bf16.mxu0 0
  %147 = vmatpush1.bf16.msra.mxu0 %v133
  %148 = vmatprep.subr.bf16.mxu0 0
  %149 = vmatpush1.bf16.msra.mxu0 %v134
  %150 = vmatprep.subr.bf16.mxu0 0
  %151 = vmatpush1.bf16.msra.mxu0 %v135
  %152 = vmatprep.subr.bf16.mxu0 0
  %153 = vmatpush1.bf16.msra.mxu0 0
  %154 = vmatprep.subr.bf16.mxu0 0
  %155 = vmatpush1.bf16.msra.mxu0 0
  %156 = vmatprep.subr.bf16.mxu0 0
  %157 = vmatpush1.bf16.msra.mxu0 0
  %158 = vmatprep.subr.bf16.mxu0 0
  %159 = vmatpush1.bf16.msra.mxu0 0
  %160 = vmatprep.subr.bf16.mxu0 0
  %161 = vmatpush1.bf16.msra.mxu0 0
  %162 = vmatprep.subr.bf16.mxu0 0
  %163 = vmatpush1.bf16.msra.mxu0 0
  %164 = vmatprep.subr.bf16.mxu0 0
  %165 = vmatpush1.bf16.msra.mxu0 0
  %166 = vmatprep.subr.bf16.mxu0 0
  %167 = vmatpush1.bf16.msra.mxu0 0
  %168 = vmatprep.subr.bf16.mxu0 0
  %169 = vmatpush1.bf16.msra.mxu0 0
  %170 = vmatprep.subr.bf16.mxu0 0
  %171 = vmatpush1.bf16.msra.mxu0 0
  %172 = vmatprep.subr.bf16.mxu0 0
  %173 = vmatpush1.bf16.msra.mxu0 0
  %174 = vmatprep.subr.bf16.mxu0 0
  %175 = vmatpush1.bf16.msra.mxu0 0
  %176 = vmatprep.mubr.bf16.mxu0 0
  %177 = vmatmul.mubr.bf16.gmra.mrb[0].mxu0 %v142
  %v178 = vpop.f32.mrb[0].mxu0
  %v179 = vadd.f32 %v114, %v178
  %v180 = vpop.f32.mrb[0].mxu0
  %v181 = vpop.f32.mrb[0].mxu0
  %v182 = vadd.f32 %v114, %v181
  %v183 = vpop.f32.mrb[0].mxu0
  %184 = vdwg.mxu0
  %v185 = vadd.f32 %v179, %v27
  %v186 = vadd.f32 %v182, %v28
  %v187 = vsel %vm53, %v185, 0.0
  %188 = vadd.xlane.f32.xlu0 %v187
  %v189 = vpop.xlane.xlu0 %188
  %v190 = vsel %vm53, %v186, 0.0
  %191 = vadd.xlane.f32.xlu0 %v190
  %v192 = vpop.xlane.xlu0 %191
  %v193 = vrcp.pop 32.0
  %v194 = vmul.f32 %v189, %v193
  %v195 = vmul.f32 %v192, %v193
  %v196 = vsub.f32 %v185, %v194
  %v197 = vsub.f32 %v186, %v195
  %v198 = vmul.f32 %v196, %v196
  %v199 = vmul.f32 %v197, %v197
  %v200 = vsel %vm53, %v198, 0.0
  %201 = vadd.xlane.f32.xlu0 %v200
  %v202 = vpop.xlane.xlu0 %201
  %v203 = vsel %vm53, %v199, 0.0
  %204 = vadd.xlane.f32.xlu0 %v203
  %v205 = vpop.xlane.xlu0 %204
  %v206 = vmul.f32 %v202, %v193
  %v207 = vmul.f32 %v205, %v193
  %v208 = vadd.f32 %v206, 1e-05
  %v209 = vadd.f32 %v207, 1e-05
  %v210 = vrsqrt.pop %v208
  %v211 = vrsqrt.pop %v209
  %v212 = vmul.f32 %v196, %v210
  %v213 = vmul.f32 %v197, %v211
  %v214 = vld [vmem:[%s5] sm:$0x1]
  %v216 = vlaneseq
  %v217 = vshrl.u32 %v216, 7
  %v218 = vsub.s32 0, %v217
  %v219 = vrot.slane %v214, %v218
  %v221 = vmul.f32 %v212, %v219
  %v222 = vmul.f32 %v213, %v219
  %v223 = vld [vmem:[%s6] sm:$0x1]
  %v225 = vlaneseq
  %v226 = vshrl.u32 %v225, 7
  %v227 = vsub.s32 0, %v226
  %v228 = vrot.slane %v223, %v227
  %v230 = vadd.f32 %v221, %v228
  %v231 = vadd.f32 %v222, %v228
  %232 = vst.msk [vmem:[%s7] sm:$0xff] %vm53, %v230
  %233 = vst.msk [vmem:[%s7 + $0x8] sm:$0xff] %vm53, %v231
  // Predicated region
  $region30: #{transformer_forward.26} parent=0 // pred_check
    _
  $region31: #{transformer_forward.26} parent=0 // pred_check_branch
    %235 = sbr.rel (0) target = $region33
  $region32: #{transformer_forward.26} parent=0 // pred_region
    _
  $region33: #{transformer_forward.26} parent=0 // pred_fallthru
    _
  // Predicated region
  $region34: #{transformer_forward.26} parent=0 // pred_check
    _
  $region35: #{transformer_forward.26} parent=0 // pred_check_branch
    %237 = sbr.rel (0) target = $region37
  $region36: #{transformer_forward.26} parent=0 // pred_region
    _
  $region37: #{transformer_forward.26} parent=0 // pred_fallthru
    _

// kernel: transformer_forward.34
$region0: #{transformer_forward.34}
  #allocation0 [shape = 'u32[]', space=smem, size = 0x4, offset = 0x4, fixed_abs, tag = 'smem constant byte address 0x4 - core index']
  #allocation1 [shape = 'u32[144,128]{1,0:T(1,128)}', space=vmem, size = 0x12000, scoped, tag = 'internal scratch']
  %s0 = inlined_call_operand.vmem [shape: f32[16,32], index: 0, kind: input, shape index: {}]
  %s1 = inlined_call_operand.vmem [shape: f32[16,32], index: 1, kind: input, shape index: {}]
  %s2 = inlined_call_operand.vmem [shape: bf16[32,32], index: 2, kind: input, shape index: {}]
  %s3 = inlined_call_operand.vmem [shape: f32[1,32], index: 3, kind: input, shape index: {}]
  %s4 = inlined_call_operand.vmem [shape: bf16[32,64], index: 4, kind: input, shape index: {}]
  %s5 = inlined_call_operand.vmem [shape: f32[1,64], index: 5, kind: input, shape index: {}]
  %s6 = inlined_call_operand.vmem [shape: bf16[16,32], index: 6, kind: output, shape index: {0}]
  %s7 = inlined_call_operand.vmem [shape: bf16[16,64], index: 7, kind: output, shape index: {1}]
  %8 = xla_tuple %s6, %s7
  %s9 = sld [smem:[#allocation0]]
  $region42: #{transformer_forward.34} parent=0
    _
  %s11 = ssub.s32 1, %s9
  %s12 = scalar_select 0, %s11, %s9
  // Predicated region
  $region2: #{transformer_forward.34} parent=0 // pred_check
    _
  $region3: #{transformer_forward.34} parent=0 // pred_check_branch
    %14 = sbr.rel (0) target = $region5
  $region4: #{transformer_forward.34} parent=0 // pred_region
    _
  $region5: #{transformer_forward.34} parent=0 // pred_fallthru
    _
  // Predicated region
  $region6: #{transformer_forward.34} parent=0 // pred_check
    _
  $region7: #{transformer_forward.34} parent=0 // pred_check_branch
    %16 = sbr.rel (0) target = $region9
  $region8: #{transformer_forward.34} parent=0 // pred_region
    _
  $region9: #{transformer_forward.34} parent=0 // pred_fallthru
    _
  // Predicated region
  $region10: #{transformer_forward.34} parent=0 // pred_check
    _
  $region11: #{transformer_forward.34} parent=0 // pred_check_branch
    %18 = sbr.rel (0) target = $region13
  $region12: #{transformer_forward.34} parent=0 // pred_region
    _
  $region13: #{transformer_forward.34} parent=0 // pred_fallthru
    _
  // Predicated region
  $region14: #{transformer_forward.34} parent=0 // pred_check
    _
  $region15: #{transformer_forward.34} parent=0 // pred_check_branch
    %20 = sbr.rel (0) target = $region17
  $region16: #{transformer_forward.34} parent=0 // pred_region
    _
  $region17: #{transformer_forward.34} parent=0 // pred_fallthru
    _
  // Predicated region
  $region18: #{transformer_forward.34} parent=0 // pred_check
    _
  $region19: #{transformer_forward.34} parent=0 // pred_check_branch
    %22 = sbr.rel (0) target = $region21
  $region20: #{transformer_forward.34} parent=0 // pred_region
    _
  $region21: #{transformer_forward.34} parent=0 // pred_fallthru
    _
  // Predicated region
  $region22: #{transformer_forward.34} parent=0 // pred_check
    _
  $region23: #{transformer_forward.34} parent=0 // pred_check_branch
    %24 = sbr.rel (0) target = $region25
  $region24: #{transformer_forward.34} parent=0 // pred_region
    _
  $region25: #{transformer_forward.34} parent=0 // pred_fallthru
    _
  %v26 = vld [vmem:[%s0] sm:$0xff]
  %v27 = vld [vmem:[%s0 + $0x8] sm:$0xff]
  %v28 = vpack.c.bf16 %v27, %v26
  %v29 = vld [vmem:[%s1] sm:$0xff]
  %v30 = vld [vmem:[%s1 + $0x8] sm:$0xff]
  %v31 = vpack.c.bf16 %v30, %v29
  %v32 = vld [vmem:[%s2] sm:$0xf]
  %v33 = vld [vmem:[%s2 + $0x4] sm:$0xf]
  %v34 = vld [vmem:[%s2 + $0x8] sm:$0xf]
  %v35 = vld [vmem:[%s2 + $0xc] sm:$0xf]
  %v36 = vld [vmem:[%s3] sm:$0x1]
  %v38 = vlaneseq
  %v39 = vshrl.u32 %v38, 7
  %v40 = vsub.s32 0, %v39
  %v41 = vrot.slane %v36, %v40
  %v47 = vunpack.c.l.b16 %v32
  %v48 = vunpack.c.l.b16 %v33
  %v49 = vunpack.c.l.b16 %v34
  %v50 = vunpack.c.l.b16 %v35
  %v51 = vpack.c.b16 %v48, %v47
  %v52 = vpack.c.b16 %v50, %v49
  %vm55 = vcmask 261120
  %v57 = vsel %vm55, %v28, 0
  %59 = vmatprep.subr.bf16.mxu0 0
  %60 = vmatpush1.bf16.msra.mxu0 %v51
  %61 = vmatprep.subr.bf16.mxu0 0
  %62 = vmatpush1.bf16.msra.mxu0 %v52
  %63 = vmatprep.subr.bf16.mxu0 0
  %64 = vmatpush1.bf16.msra.mxu0 0
  %65 = vmatprep.subr.bf16.mxu0 0
  %66 = vmatpush1.bf16.msra.mxu0 0
  %67 = vmatprep.subr.bf16.mxu0 0
  %68 = vmatpush1.bf16.msra.mxu0 0
  %69 = vmatprep.subr.bf16.mxu0 0
  %70 = vmatpush1.bf16.msra.mxu0 0
  %71 = vmatprep.subr.bf16.mxu0 0
  %72 = vmatpush1.bf16.msra.mxu0 0
  %73 = vmatprep.subr.bf16.mxu0 0
  %74 = vmatpush1.bf16.msra.mxu0 0
  %75 = vmatprep.subr.bf16.mxu0 0
  %76 = vmatpush1.bf16.msra.mxu0 0
  %77 = vmatprep.subr.bf16.mxu0 0
  %78 = vmatpush1.bf16.msra.mxu0 0
  %79 = vmatprep.subr.bf16.mxu0 0
  %80 = vmatpush1.bf16.msra.mxu0 0
  %81 = vmatprep.subr.bf16.mxu0 0
  %82 = vmatpush1.bf16.msra.mxu0 0
  %83 = vmatprep.subr.bf16.mxu0 0
  %84 = vmatpush1.bf16.msra.mxu0 0
  %85 = vmatprep.subr.bf16.mxu0 0
  %86 = vmatpush1.bf16.msra.mxu0 0
  %87 = vmatprep.subr.bf16.mxu0 0
  %88 = vmatpush1.bf16.msra.mxu0 0
  %89 = vmatprep.subr.bf16.mxu0 0
  %90 = vmatpush1.bf16.msra.mxu0 0
  %91 = vmatprep.mubr.bf16.mxu0 0
  %92 = vmatmul.mubr.bf16.gmra.mrb[0].mxu0 %v57
  %v93 = vpop.f32.mrb[0].mxu0
  %v94 = vadd.f32 %v41, %v93
  %v95 = vpop.f32.mrb[0].mxu0
  %v96 = vpop.f32.mrb[0].mxu0
  %v97 = vadd.f32 %v41, %v96
  %v98 = vpop.f32.mrb[0].mxu0
  %99 = vdwg.mxu0
  %v100 = vpack.c.bf16 %v97, %v94
  %v102 = vunpack.c.l.b16 %v100
  %v103 = vunpack.c.h.b16 %v100
  %v104 = vpack.c.b16 %v102, %v102
  %v105 = vpack.c.b16 %v103, %v103
  %vm108 = vcmask 257024
  %109 = vst.msk [vmem:[%s6] sm:$0xf] %vm108, %v104
  %110 = vst.msk [vmem:[%s6 + $0x4] sm:$0xf] %vm108, %v105
  %v111 = vld [vmem:[%s4] sm:$0xf]
  %v112 = vld [vmem:[%s4 + $0x4] sm:$0xf]
  %v113 = vld [vmem:[%s4 + $0x8] sm:$0xf]
  %v114 = vld [vmem:[%s4 + $0xc] sm:$0xf]
  %v115 = vld [vmem:[%s5] sm:$0x1]
  %v117 = vlaneseq
  %v118 = vshrl.u32 %v117, 7
  %v119 = vsub.s32 0, %v118
  %v120 = vrot.slane %v115, %v119
  %v126 = vunpack.c.l.b16 %v111
  %v127 = vunpack.c.l.b16 %v112
  %v128 = vunpack.c.l.b16 %v113
  %v129 = vunpack.c.l.b16 %v114
  %v130 = vpack.c.b16 %v127, %v126
  %v131 = vpack.c.b16 %v129, %v128
  %v135 = vsel %vm55, %v31, 0
  %137 = vmatprep.subr.bf16.mxu0 0
  %138 = vmatpush1.bf16.msra.mxu0 %v130
  %139 = vmatprep.subr.bf16.mxu0 0
  %140 = vmatpush1.bf16.msra.mxu0 %v131
  %141 = vmatprep.subr.bf16.mxu0 0
  %142 = vmatpush1.bf16.msra.mxu0 0
  %143 = vmatprep.subr.bf16.mxu0 0
  %144 = vmatpush1.bf16.msra.mxu0 0
  %145 = vmatprep.subr.bf16.mxu0 0
  %146 = vmatpush1.bf16.msra.mxu0 0
  %147 = vmatprep.subr.bf16.mxu0 0
  %148 = vmatpush1.bf16.msra.mxu0 0
  %149 = vmatprep.subr.bf16.mxu0 0
  %150 = vmatpush1.bf16.msra.mxu0 0
  %151 = vmatprep.subr.bf16.mxu0 0
  %152 = vmatpush1.bf16.msra.mxu0 0
  %153 = vmatprep.subr.bf16.mxu0 0
  %154 = vmatpush1.bf16.msra.mxu0 0
  %155 = vmatprep.subr.bf16.mxu0 0
  %156 = vmatpush1.bf16.msra.mxu0 0
  %157 = vmatprep.subr.bf16.mxu0 0
  %158 = vmatpush1.bf16.msra.mxu0 0
  %159 = vmatprep.subr.bf16.mxu0 0
  %160 = vmatpush1.bf16.msra.mxu0 0
  %161 = vmatprep.subr.bf16.mxu0 0
  %162 = vmatpush1.bf16.msra.mxu0 0
  %163 = vmatprep.subr.bf16.mxu0 0
  %164 = vmatpush1.bf16.msra.mxu0 0
  %165 = vmatprep.subr.bf16.mxu0 0
  %166 = vmatpush1.bf16.msra.mxu0 0
  %167 = vmatprep.subr.bf16.mxu0 0
  %168 = vmatpush1.bf16.msra.mxu0 0
  %169 = vmatprep.mubr.bf16.mxu0 0
  %170 = vmatmul.mubr.bf16.gmra.mrb[0].mxu0 %v135
  %v171 = vpop.f32.mrb[0].mxu0
  %v172 = vadd.f32 %v120, %v171
  %v173 = vpop.f32.mrb[0].mxu0
  %v174 = vpop.f32.mrb[0].mxu0
  %v175 = vadd.f32 %v120, %v174
  %v176 = vpop.f32.mrb[0].mxu0
  %177 = vdwg.mxu0
  %v178 = vpack.c.bf16 %v175, %v172
  %v180 = vunpack.c.l.b16 %v178
  %v181 = vunpack.c.h.b16 %v178
  %v182 = vpack.c.b16 %v180, %v180
  %v183 = vpack.c.b16 %v181, %v181
  %vm186 = vcmask 519168
  %187 = vst.msk [vmem:[%s7] sm:$0xf] %vm186, %v182
  %188 = vst.msk [vmem:[%s7 + $0x4] sm:$0xf] %vm186, %v183
  // Predicated region
  $region26: #{transformer_forward.34} parent=0 // pred_check
    _
  $region27: #{transformer_forward.34} parent=0 // pred_check_branch
    %190 = sbr.rel (0) target = $region29
  $region28: #{transformer_forward.34} parent=0 // pred_region
    _
  $region29: #{transformer_forward.34} parent=0 // pred_fallthru
    _
  // Predicated region
  $region30: #{transformer_forward.34} parent=0 // pred_check
    _
  $region31: #{transformer_forward.34} parent=0 // pred_check_branch
    %192 = sbr.rel (0) target = $region33
  $region32: #{transformer_forward.34} parent=0 // pred_region
    _
  $region33: #{transformer_forward.34} parent=0 // pred_fallthru
    _
  // Predicated region
  $region34: #{transformer_forward.34} parent=0 // pred_check
    _
  $region35: #{transformer_forward.34} parent=0 // pred_check_branch
    %194 = sbr.rel (0) target = $region37
  $region36: #{transformer_forward.34} parent=0 // pred_region
    _
  $region37: #{transformer_forward.34} parent=0 // pred_fallthru
    _
  // Predicated region
  $region38: #{transformer_forward.34} parent=0 // pred_check
    _
  $region39: #{transformer_forward.34} parent=0 // pred_check_branch
    %196 = sbr.rel (0) target = $region41
  $region40: #{transformer_forward.34} parent=0 // pred_region
    _
  $region41: #{transformer_forward.34} parent=0 // pred_fallthru
    _

// kernel: transformer_forward.45
$region0: #{transformer_forward.45}
  #allocation0 [shape = 'u32[]', space=smem, size = 0x4, offset = 0x4, fixed_abs, tag = 'smem constant byte address 0x4 - core index']
  #allocation1 [shape = 'u32[144,128]{1,0:T(1,128)}', space=vmem, size = 0x12000, scoped, tag = 'internal scratch']
  %s0 = inlined_call_operand.vmem [shape: f32[16,32], index: 0, kind: input, shape index: {}]
  %s1 = inlined_call_operand.vmem [shape: bf16[32,128], index: 1, kind: input, shape index: {}]
  %s2 = inlined_call_operand.vmem [shape: f32[1,128], index: 2, kind: input, shape index: {}]
  %s3 = inlined_call_operand.vmem [shape: f32[16,128], index: 3, kind: output, shape index: {}]
  %s4 = sld [smem:[#allocation0]]
  $region22: #{transformer_forward.45} parent=0
    _
  %s6 = ssub.s32 1, %s4
  %s7 = scalar_select 0, %s6, %s4
  // Predicated region
  $region2: #{transformer_forward.45} parent=0 // pred_check
    _
  $region3: #{transformer_forward.45} parent=0 // pred_check_branch
    %9 = sbr.rel (0) target = $region5
  $region4: #{transformer_forward.45} parent=0 // pred_region
    _
  $region5: #{transformer_forward.45} parent=0 // pred_fallthru
    _
  // Predicated region
  $region6: #{transformer_forward.45} parent=0 // pred_check
    _
  $region7: #{transformer_forward.45} parent=0 // pred_check_branch
    %11 = sbr.rel (0) target = $region9
  $region8: #{transformer_forward.45} parent=0 // pred_region
    _
  $region9: #{transformer_forward.45} parent=0 // pred_fallthru
    _
  // Predicated region
  $region10: #{transformer_forward.45} parent=0 // pred_check
    _
  $region11: #{transformer_forward.45} parent=0 // pred_check_branch
    %13 = sbr.rel (0) target = $region13
  $region12: #{transformer_forward.45} parent=0 // pred_region
    _
  $region13: #{transformer_forward.45} parent=0 // pred_fallthru
    _
  %v15 = vld [vmem:[%s0] sm:$0xff]
  %v16 = vld [vmem:[%s0 + $0x8] sm:$0xff]
  %v17 = vpack.c.bf16 %v16, %v15
  %v18 = vld [vmem:[%s1] sm:$0xf]
  %v19 = vld [vmem:[%s1 + $0x4] sm:$0xf]
  %v20 = vld [vmem:[%s1 + $0x8] sm:$0xf]
  %v21 = vld [vmem:[%s1 + $0xc] sm:$0xf]
  %v22 = vld [vmem:[%s2] sm:$0x1]
  %v24 = vlaneseq
  %v25 = vshrl.u32 %v24, 7
  %v26 = vsub.s32 0, %v25
  %v27 = vrot.slane %v22, %v26
  %v33 = vunpack.c.l.b16 %v18
  %v34 = vunpack.c.l.b16 %v19
  %v35 = vunpack.c.l.b16 %v20
  %v36 = vunpack.c.l.b16 %v21
  %v37 = vpack.c.b16 %v34, %v33
  %v38 = vpack.c.b16 %v36, %v35
  %vm41 = vcmask 261120
  %v43 = vsel %vm41, %v17, 0
  %45 = vmatprep.subr.bf16.mxu0 0
  %46 = vmatpush1.bf16.msra.mxu0 %v37
  %47 = vmatprep.subr.bf16.mxu0 0
  %48 = vmatpush1.bf16.msra.mxu0 %v38
  %49 = vmatprep.subr.bf16.mxu0 0
  %50 = vmatpush1.bf16.msra.mxu0 0
  %51 = vmatprep.subr.bf16.mxu0 0
  %52 = vmatpush1.bf16.msra.mxu0 0
  %53 = vmatprep.subr.bf16.mxu0 0
  %54 = vmatpush1.bf16.msra.mxu0 0
  %55 = vmatprep.subr.bf16.mxu0 0
  %56 = vmatpush1.bf16.msra.mxu0 0
  %57 = vmatprep.subr.bf16.mxu0 0
  %58 = vmatpush1.bf16.msra.mxu0 0
  %59 = vmatprep.subr.bf16.mxu0 0
  %60 = vmatpush1.bf16.msra.mxu0 0
  %61 = vmatprep.subr.bf16.mxu0 0
  %62 = vmatpush1.bf16.msra.mxu0 0
  %63 = vmatprep.subr.bf16.mxu0 0
  %64 = vmatpush1.bf16.msra.mxu0 0
  %65 = vmatprep.subr.bf16.mxu0 0
  %66 = vmatpush1.bf16.msra.mxu0 0
  %67 = vmatprep.subr.bf16.mxu0 0
  %68 = vmatpush1.bf16.msra.mxu0 0
  %69 = vmatprep.subr.bf16.mxu0 0
  %70 = vmatpush1.bf16.msra.mxu0 0
  %71 = vmatprep.subr.bf16.mxu0 0
  %72 = vmatpush1.bf16.msra.mxu0 0
  %73 = vmatprep.subr.bf16.mxu0 0
  %74 = vmatpush1.bf16.msra.mxu0 0
  %75 = vmatprep.subr.bf16.mxu0 0
  %76 = vmatpush1.bf16.msra.mxu0 0
  %77 = vmatprep.mubr.bf16.mxu0 0
  %78 = vmatmul.mubr.bf16.gmra.mrb[0].mxu0 %v43
  %v79 = vpop.f32.mrb[0].mxu0
  %v80 = vadd.f32 %v27, %v79
  %v81 = vpop.f32.mrb[0].mxu0
  %v82 = vpop.f32.mrb[0].mxu0
  %v83 = vadd.f32 %v27, %v82
  %v84 = vpop.f32.mrb[0].mxu0
  %85 = vdwg.mxu0
  %86 = vst [vmem:[%s3] sm:$0xff] %v80
  %87 = vst [vmem:[%s3 + $0x8] sm:$0xff] %v83
  // Predicated region
  $region14: #{transformer_forward.45} parent=0 // pred_check
    _
  $region15: #{transformer_forward.45} parent=0 // pred_check_branch
    %89 = sbr.rel (0) target = $region17
  $region16: #{transformer_forward.45} parent=0 // pred_region
    _
  $region17: #{transformer_forward.45} parent=0 // pred_fallthru
    _
  // Predicated region
  $region18: #{transformer_forward.45} parent=0 // pred_check
    _
  $region19: #{transformer_forward.45} parent=0 // pred_check_branch
    %91 = sbr.rel (0) target = $region21
  $region20: #{transformer_forward.45} parent=0 // pred_region
    _
  $region21: #{transformer_forward.45} parent=0 // pred_fallthru
    _

</llo_original>
